<compile_context>
chip_gen: v5e
topology: v5e:2x2
jax: 0.10.0
libtpu: 0.0.40
codegen_flags: <defaults>
</compile_context>

<pallas_src>
import jax
import jax.numpy as jnp
from jax.experimental import pallas as pl
from jax.experimental.pallas import tpu as pltpu

M_DIM = 500            # self.M
M_PAD = 512            # M padded to a multiple of 128 (lane-dense tiles)
L_DIM = 128            # self.L
IN_DIM = 1024          # Linear(1024, M)
ATTENTION_BRANCHES = 1


def attention_kernel(x_ref, w1_ref, b1_ref, wa1_ref, ba1_ref,
                     wa2_ref, ba2_ref, wc_ref, bc_ref, y_ref):
    # feature_extractor_part2: Linear(1024, 500 -> 512 padded) + ReLU
    x = x_ref[...]                                                     # (K, 1024) bf16
    h = jnp.dot(x, w1_ref[...], preferred_element_type=jnp.float32)    # (K, 512) f32
    h = jnp.maximum(h + b1_ref[...], 0.0)

    # attention MLP: Linear(512p, 128) + tanh (padded rows of wa1 are zero)
    t = jnp.dot(h.astype(jnp.bfloat16), wa1_ref[...],
                preferred_element_type=jnp.float32)                    # (K, 128)
    t = jnp.tanh(t + ba1_ref[...])

    # Linear(128, 1): lane-width-1 MXU matmul replaced by VPU multiply +
    # XLU lane reduction against wa2 laid out as a (1, 128) row.
    logit = jnp.sum(t * wa2_ref[...], axis=-1, keepdims=True) + ba2_ref[...]  # (K, 1)

    # softmax over the instance axis (torch: softmax(A^T, dim=1))
    logit = logit - jnp.max(logit, axis=0, keepdims=True)
    e = jnp.exp(logit)
    attn = e * pl.reciprocal(jnp.sum(e, axis=0, keepdims=True), approx=True)  # (K, 1)

    # Z = A^T @ H == sum_k attn[k] * H[k, :]   (sublane reduce on the VPU/XLU)
    z = jnp.sum(attn * h, axis=0, keepdims=True)                       # (1, 512)

    # classifier: Linear(512p, C_pad); padded rows/cols of wc are zero.
    y = jnp.dot(z.astype(jnp.bfloat16), wc_ref[...],
                preferred_element_type=jnp.float32)                    # (1, C_pad)
    y_ref[...] = y + bc_ref[...]


def make_params(key, num_classes):
    """f32 parameters with the same shapes as the PyTorch module."""
    ks = jax.random.split(key, 8)
    s = 0.02
    return dict(
        w1=s * jax.random.normal(ks[0], (IN_DIM, M_DIM), jnp.float32),
        b1=s * jax.random.normal(ks[1], (1, M_DIM), jnp.float32),
        wa1=s * jax.random.normal(ks[2], (M_DIM, L_DIM), jnp.float32),
        ba1=s * jax.random.normal(ks[3], (1, L_DIM), jnp.float32),
        wa2=s * jax.random.normal(ks[4], (L_DIM, ATTENTION_BRANCHES), jnp.float32),
        ba2=s * jax.random.normal(ks[5], (1, ATTENTION_BRANCHES), jnp.float32),
        wc=s * jax.random.normal(ks[6], (M_DIM * ATTENTION_BRANCHES, num_classes), jnp.float32),
        bc=s * jax.random.normal(ks[7], (1, num_classes), jnp.float32),
    )


def _pad_to(a, shape):
    return jnp.pad(a, [(0, s - d) for d, s in zip(a.shape, shape)])


def prepare_kernel_params(params):
    """Pad to lane-dense shapes and cast matmul weights to bf16 (zero pad -> exact)."""
    num_classes = params["wc"].shape[1]
    c_pad = pl.cdiv(num_classes, 128) * 128
    return dict(
        w1=_pad_to(params["w1"], (IN_DIM, M_PAD)).astype(jnp.bfloat16),
        b1=_pad_to(params["b1"], (1, M_PAD)),
        wa1=_pad_to(params["wa1"], (M_PAD, L_DIM)).astype(jnp.bfloat16),
        ba1=params["ba1"],
        wa2_row=params["wa2"].T,                       # (1, 128) f32 for the VPU reduce
        ba2=params["ba2"],                             # (1, 1)
        wc=_pad_to(params["wc"], (M_PAD, c_pad)).astype(jnp.bfloat16),
        bc=_pad_to(params["bc"], (1, c_pad)),
    )


def attention_forward_batched(x, params):
    """x: (B, K, 1024) f32 — B independent bags. Returns Y_prob: (B, num_classes)."""
    B, K, in_dim = x.shape
    assert in_dim == IN_DIM
    num_classes = params["wc"].shape[1]
    kp = prepare_kernel_params(params)
    c_pad = kp["wc"].shape[1]
    xb = x.astype(jnp.bfloat16)

    const2 = lambda b: (0, 0)  # constant block index -> weights stay VMEM-resident

    flops_per_bag = (2 * K * IN_DIM * M_PAD + 2 * K * M_PAD * L_DIM
                     + 2 * K * L_DIM + 2 * K * M_PAD + 2 * M_PAD * c_pad)
    weight_bytes = ((IN_DIM * M_PAD + M_PAD * L_DIM + M_PAD * c_pad) * 2
                    + (M_PAD + L_DIM + L_DIM + 1 + c_pad) * 4)
    cost = pl.CostEstimate(
        flops=B * flops_per_bag,
        transcendentals=B * (K * L_DIM + K),
        bytes_accessed=B * K * IN_DIM * 2 + weight_bytes + B * c_pad * 4,
    )

    out = pl.pallas_call(
        attention_kernel,
        out_shape=jax.ShapeDtypeStruct((B, 1, c_pad), jnp.float32),
        grid=(B,),
        in_specs=[
            pl.BlockSpec((None, K, IN_DIM), lambda b: (b, 0, 0)),  # per-bag x tile
            pl.BlockSpec((IN_DIM, M_PAD), const2),                 # w1   (resident)
            pl.BlockSpec((1, M_PAD), const2),                      # b1
            pl.BlockSpec((M_PAD, L_DIM), const2),                  # wa1
            pl.BlockSpec((1, L_DIM), const2),                      # ba1
            pl.BlockSpec((1, L_DIM), const2),                      # wa2 row
            pl.BlockSpec((1, 1), const2),                          # ba2
            pl.BlockSpec((M_PAD, c_pad), const2),                  # wc
            pl.BlockSpec((1, c_pad), const2),                      # bc
        ],
        out_specs=pl.BlockSpec((None, 1, c_pad), lambda b: (b, 0, 0)),
        compiler_params=pltpu.CompilerParams(
            dimension_semantics=("parallel",),       # shard bags on v7x's 2 TCs
            vmem_limit_bytes=32 * 1024 * 1024,       # v5e default is only 16 MiB
        ),
        cost_estimate=cost,
    )(xb, kp["w1"], kp["b1"], kp["wa1"], kp["ba1"],
      kp["wa2_row"], kp["ba2"], kp["wc"], kp["bc"])

    return out[:, 0, :num_classes]


def attention_forward(x, params):
    """Module-equivalent forward: x (1, K, 1024) -> Y_prob (1, num_classes)."""
    # TODO(synk): for very large K the instance axis should be grid-tiled with
    # an online-softmax accumulator; single-block-per-bag is fine at demo sizes.
    return attention_forward_batched(x, params)


def _bag_ref(xk, params):
    h = jnp.maximum(xk @ params["w1"] + params["b1"], 0.0)
    a = jnp.tanh(h @ params["wa1"] + params["ba1"]) @ params["wa2"] + params["ba2"]
    a = jax.nn.softmax(a.T, axis=1)
    z = a @ h
    return (z @ params["wc"] + params["bc"])[0]


def attention_forward_ref(x, params):
    """Pure-JAX f32 reference mirroring the PyTorch forward (per bag)."""
    return jax.vmap(lambda xk: _bag_ref(xk, params))(x)


if __name__ == "__main__":
    key = jax.random.PRNGKey(0)
    k_x, k_p, k_xb = jax.random.split(key, 3)

    K = 8                # bag size (number of instances)
    num_classes = 2
    params = make_params(k_p, num_classes)

    # Module-equivalent single bag: (1, K, 1024)
    x = jax.random.normal(k_x, (1, K, IN_DIM), jnp.float32)
    y = jax.block_until_ready(attention_forward(x, params))
    y_ref = attention_forward_ref(x, params)
    assert y.shape == (1, num_classes)
    assert jnp.allclose(y, y_ref, atol=2e-2, rtol=2e-2), (y, y_ref)

    # Batched bags: grid over B with weights resident across steps.
    B = 4
    xb = jax.random.normal(k_xb, (B, K, IN_DIM), jnp.float32)
    yb = jax.block_until_ready(attention_forward_batched(xb, params))
    yb_ref = attention_forward_ref(xb, params)
    assert yb.shape == (B, num_classes)
    assert jnp.allclose(yb, yb_ref, atol=2e-2, rtol=2e-2), (yb, yb_ref)

    # TODO(synk): feature_extractor_part1 (conv stack) is dead code in the
    # PyTorch forward(); Y_hat is computed but not returned there, so neither
    # is implemented here.
    print("KERNEL_OK")
</pallas_src>

<mosaic_0001>
module attributes {stable_mosaic.version = 11 : i64} {
  func.func @attention_kernel(%arg0: i32, %arg1: memref<1x8x1024xbf16, #tpu.memory_space<vmem>>, %arg2: memref<1024x512xbf16, #tpu.memory_space<vmem>>, %arg3: memref<1x512xf32, #tpu.memory_space<vmem>>, %arg4: memref<512x128xbf16, #tpu.memory_space<vmem>>, %arg5: memref<1x128xf32, #tpu.memory_space<vmem>>, %arg6: memref<1x128xf32, #tpu.memory_space<vmem>>, %arg7: memref<1x1xf32, #tpu.memory_space<vmem>>, %arg8: memref<512x128xbf16, #tpu.memory_space<vmem>>, %arg9: memref<1x128xf32, #tpu.memory_space<vmem>>, %arg10: memref<1x1x128xf32, #tpu.memory_space<vmem>>) attributes {dimension_semantics = [#tpu.dimension_semantics<parallel>], iteration_bounds = array<i64: 1>, scalar_prefetch = 0 : i64, scratch_operands = 0 : i64, tpu.core_type = #tpu.core_type<tc>, window_params = [{transform_indices = @transform_0, window_bounds = array<i64: 1, 8, 1024>}, {pipeline_mode = #tpu.pipeline_mode<synchronous>, transform_indices = @transform_1, window_bounds = array<i64: 1024, 512>}, {pipeline_mode = #tpu.pipeline_mode<synchronous>, transform_indices = @transform_2, window_bounds = array<i64: 1, 512>}, {pipeline_mode = #tpu.pipeline_mode<synchronous>, transform_indices = @transform_3, window_bounds = array<i64: 512, 128>}, {pipeline_mode = #tpu.pipeline_mode<synchronous>, transform_indices = @transform_4, window_bounds = array<i64: 1, 128>}, {pipeline_mode = #tpu.pipeline_mode<synchronous>, transform_indices = @transform_5, window_bounds = array<i64: 1, 128>}, {pipeline_mode = #tpu.pipeline_mode<synchronous>, transform_indices = @transform_6, window_bounds = array<i64: 1, 1>}, {pipeline_mode = #tpu.pipeline_mode<synchronous>, transform_indices = @transform_7, window_bounds = array<i64: 512, 128>}, {pipeline_mode = #tpu.pipeline_mode<synchronous>, transform_indices = @transform_8, window_bounds = array<i64: 1, 128>}, {transform_indices = @transform_9, window_bounds = array<i64: 1, 1, 128>}]} {
    %c0 = arith.constant 0 : index
    %c0_0 = arith.constant 0 : index
    %c0_1 = arith.constant 0 : index
    %0 = vector.load %arg1[%c0, %c0_0, %c0_1] : memref<1x8x1024xbf16, #tpu.memory_space<vmem>>, vector<1x8x1024xbf16>
    %1 = vector.shape_cast %0 : vector<1x8x1024xbf16> to vector<8x1024xbf16>
    %c0_2 = arith.constant 0 : index
    %c0_3 = arith.constant 0 : index
    %2 = vector.load %arg2[%c0_2, %c0_3] : memref<1024x512xbf16, #tpu.memory_space<vmem>>, vector<1024x512xbf16>
    %cst = arith.constant dense<0.000000e+00> : vector<8x512xf32>
    %3 = tpu.matmul %1, %2, %cst {dimension_numbers = #tpu.dot_dimension_numbers<[1], [0], [0], [1], [0, 0, 1, 1], [], []>} : vector<8x1024xbf16>, vector<1024x512xbf16>, vector<8x512xf32> -> vector<8x512xf32>
    %c0_4 = arith.constant 0 : index
    %c0_5 = arith.constant 0 : index
    %4 = vector.load %arg3[%c0_4, %c0_5] : memref<1x512xf32, #tpu.memory_space<vmem>>, vector<1x512xf32>
    %5 = vector.broadcast %4 : vector<1x512xf32> to vector<8x512xf32>
    %6 = arith.addf %3, %5 : vector<8x512xf32>
    %cst_6 = arith.constant 0.000000e+00 : f32
    %7 = vector.broadcast %cst_6 : f32 to vector<8x512xf32>
    %8 = arith.maximumf %6, %7 : vector<8x512xf32>
    %9 = arith.truncf %8 : vector<8x512xf32> to vector<8x512xbf16>
    %c0_7 = arith.constant 0 : index
    %c0_8 = arith.constant 0 : index
    %10 = vector.load %arg4[%c0_7, %c0_8] : memref<512x128xbf16, #tpu.memory_space<vmem>>, vector<512x128xbf16>
    %cst_9 = arith.constant dense<0.000000e+00> : vector<8x128xf32>
    %11 = tpu.matmul %9, %10, %cst_9 {dimension_numbers = #tpu.dot_dimension_numbers<[1], [0], [0], [1], [0, 0, 1, 1], [], []>} : vector<8x512xbf16>, vector<512x128xbf16>, vector<8x128xf32> -> vector<8x128xf32>
    %c0_10 = arith.constant 0 : index
    %c0_11 = arith.constant 0 : index
    %12 = vector.load %arg5[%c0_10, %c0_11] : memref<1x128xf32, #tpu.memory_space<vmem>>, vector<1x128xf32>
    %13 = vector.broadcast %12 : vector<1x128xf32> to vector<8x128xf32>
    %14 = arith.addf %11, %13 : vector<8x128xf32>
    %15 = math.tanh %14 : vector<8x128xf32>
    %c0_12 = arith.constant 0 : index
    %c0_13 = arith.constant 0 : index
    %16 = vector.load %arg6[%c0_12, %c0_13] : memref<1x128xf32, #tpu.memory_space<vmem>>, vector<1x128xf32>
    %17 = vector.broadcast %16 : vector<1x128xf32> to vector<8x128xf32>
    %18 = arith.mulf %15, %17 : vector<8x128xf32>
    %cst_14 = arith.constant dense<0.000000e+00> : vector<8xf32>
    %19 = vector.multi_reduction <add>, %18, %cst_14 [1] : vector<8x128xf32> to vector<8xf32>
    %20 = vector.shape_cast %19 : vector<8xf32> to vector<8x1xf32>
    %c0_15 = arith.constant 0 : index
    %c0_16 = arith.constant 0 : index
    %21 = vector.load %arg7[%c0_15, %c0_16] : memref<1x1xf32, #tpu.memory_space<vmem>>, vector<1x1xf32>
    %22 = vector.broadcast %21 : vector<1x1xf32> to vector<8x1xf32>
    %23 = arith.addf %20, %22 : vector<8x1xf32>
    %cst_17 = arith.constant dense<0xFF800000> : vector<1xf32>
    %24 = vector.multi_reduction <maximumf>, %23, %cst_17 [0] : vector<8x1xf32> to vector<1xf32>
    %25 = vector.shape_cast %24 : vector<1xf32> to vector<1x1xf32>
    %26 = vector.broadcast %25 : vector<1x1xf32> to vector<8x1xf32>
    %27 = arith.subf %23, %26 : vector<8x1xf32>
    %28 = math.exp %27 : vector<8x1xf32>
    %cst_18 = arith.constant dense<0.000000e+00> : vector<1xf32>
    %29 = vector.multi_reduction <add>, %28, %cst_18 [0] : vector<8x1xf32> to vector<1xf32>
    %30 = vector.shape_cast %29 : vector<1xf32> to vector<1x1xf32>
    %31 = tpu.reciprocal %30 {approx = true} : vector<1x1xf32> -> vector<1x1xf32>
    %32 = vector.broadcast %31 : vector<1x1xf32> to vector<8x1xf32>
    %33 = arith.mulf %28, %32 : vector<8x1xf32>
    %34 = vector.broadcast %33 : vector<8x1xf32> to vector<8x512xf32>
    %35 = arith.mulf %34, %8 : vector<8x512xf32>
    %cst_19 = arith.constant dense<0.000000e+00> : vector<512xf32>
    %36 = vector.multi_reduction <add>, %35, %cst_19 [0] : vector<8x512xf32> to vector<512xf32>
    %37 = vector.shape_cast %36 : vector<512xf32> to vector<1x512xf32>
    %38 = arith.truncf %37 : vector<1x512xf32> to vector<1x512xbf16>
    %c0_20 = arith.constant 0 : index
    %c0_21 = arith.constant 0 : index
    %39 = vector.load %arg8[%c0_20, %c0_21] : memref<512x128xbf16, #tpu.memory_space<vmem>>, vector<512x128xbf16>
    %cst_22 = arith.constant dense<0.000000e+00> : vector<1x128xf32>
    %40 = tpu.matmul %38, %39, %cst_22 {dimension_numbers = #tpu.dot_dimension_numbers<[1], [0], [0], [1], [0, 0, 1, 1], [], []>} : vector<1x512xbf16>, vector<512x128xbf16>, vector<1x128xf32> -> vector<1x128xf32>
    %c0_23 = arith.constant 0 : index
    %c0_24 = arith.constant 0 : index
    %41 = vector.load %arg9[%c0_23, %c0_24] : memref<1x128xf32, #tpu.memory_space<vmem>>, vector<1x128xf32>
    %42 = arith.addf %40, %41 : vector<1x128xf32>
    %c0_25 = arith.constant 0 : index
    %c0_26 = arith.constant 0 : index
    %c0_27 = arith.constant 0 : index
    %43 = vector.load %arg10[%c0_25, %c0_26, %c0_27] : memref<1x1x128xf32, #tpu.memory_space<vmem>>, vector<1x1x128xf32>
    %44 = vector.shape_cast %43 : vector<1x1x128xf32> to vector<1x128xf32>
    %45 = vector.shape_cast %42 : vector<1x128xf32> to vector<1x1x128xf32>
    tpu.vector_store %arg10[%c0_25, %c0_26, %c0_27], %45 {strides = array<i32>} : memref<1x1x128xf32, #tpu.memory_space<vmem>>, vector<1x1x128xf32>,
    return
  }
  func.func @transform_0(%arg0: i32) -> (i32, i32, i32) {
    %c0_i32 = arith.constant 0 : i32
    %c0_i32_0 = arith.constant 0 : i32
    %c0_i32_1 = arith.constant 0 : i32
    return %arg0, %c0_i32, %c0_i32_0 : i32, i32, i32
  }
  func.func @transform_1(%arg0: i32) -> (i32, i32) {
    %c0_i32 = arith.constant 0 : i32
    %c0_i32_0 = arith.constant 0 : i32
    %c0_i32_1 = arith.constant 0 : i32
    return %c0_i32, %c0_i32_0 : i32, i32
  }
  func.func @transform_2(%arg0: i32) -> (i32, i32) {
    %c0_i32 = arith.constant 0 : i32
    %c0_i32_0 = arith.constant 0 : i32
    %c0_i32_1 = arith.constant 0 : i32
    return %c0_i32, %c0_i32_0 : i32, i32
  }
  func.func @transform_3(%arg0: i32) -> (i32, i32) {
    %c0_i32 = arith.constant 0 : i32
    %c0_i32_0 = arith.constant 0 : i32
    %c0_i32_1 = arith.constant 0 : i32
    return %c0_i32, %c0_i32_0 : i32, i32
  }
  func.func @transform_4(%arg0: i32) -> (i32, i32) {
    %c0_i32 = arith.constant 0 : i32
    %c0_i32_0 = arith.constant 0 : i32
    %c0_i32_1 = arith.constant 0 : i32
    return %c0_i32, %c0_i32_0 : i32, i32
  }
  func.func @transform_5(%arg0: i32) -> (i32, i32) {
    %c0_i32 = arith.constant 0 : i32
    %c0_i32_0 = arith.constant 0 : i32
    %c0_i32_1 = arith.constant 0 : i32
    return %c0_i32, %c0_i32_0 : i32, i32
  }
  func.func @transform_6(%arg0: i32) -> (i32, i32) {
    %c0_i32 = arith.constant 0 : i32
    %c0_i32_0 = arith.constant 0 : i32
    %c0_i32_1 = arith.constant 0 : i32
    return %c0_i32, %c0_i32_0 : i32, i32
  }
  func.func @transform_7(%arg0: i32) -> (i32, i32) {
    %c0_i32 = arith.constant 0 : i32
    %c0_i32_0 = arith.constant 0 : i32
    %c0_i32_1 = arith.constant 0 : i32
    return %c0_i32, %c0_i32_0 : i32, i32
  }
  func.func @transform_8(%arg0: i32) -> (i32, i32) {
    %c0_i32 = arith.constant 0 : i32
    %c0_i32_0 = arith.constant 0 : i32
    %c0_i32_1 = arith.constant 0 : i32
    return %c0_i32, %c0_i32_0 : i32, i32
  }
  func.func @transform_9(%arg0: i32) -> (i32, i32, i32) {
    %c0_i32 = arith.constant 0 : i32
    %c0_i32_0 = arith.constant 0 : i32
    %c0_i32_1 = arith.constant 0 : i32
    return %arg0, %c0_i32, %c0_i32_0 : i32, i32, i32
  }
}

</mosaic_0001>

<llo_original>
// kernel: tpu_custom_call.1
$region0: #{tpu_custom_call.1}
  #allocation0 [shape = 'u32[]', space=smem, size = 0x4, offset = 0x4, fixed_abs, tag = 'smem constant byte address 0x4 - core index']
  #allocation1 [shape = 'u32[72,128]{1,0:T(1,128)}', space=vmem, size = 0x9000, scoped, tag = 'internal scratch']
  #allocation2 [shape = 'f32[1,1]{1,0:T(1,128)S(1)}', space=vmem, size = 0x200, scoped, tag = 'scoped memory for tpu_custom_call.1']
  %s0 = inlined_call_operand.hbm [shape: bf16[1,8,1024], index: 0, kind: input, shape index: {}]
  %s1 = inlined_call_operand.hbm [shape: bf16[1024,512], index: 1, kind: input, shape index: {}]
  %s2 = inlined_call_operand.hbm [shape: f32[1,512], index: 2, kind: input, shape index: {}]
  %s3 = inlined_call_operand.hbm [shape: bf16[512,128], index: 3, kind: input, shape index: {}]
  %s4 = inlined_call_operand.vmem [shape: f32[1,128], index: 4, kind: input, shape index: {}]
  %s5 = inlined_call_operand.vmem [shape: f32[1,128], index: 5, kind: input, shape index: {}]
  %s6 = inlined_call_operand.<no memory space> [shape: f32[1,1], index: 6, kind: input, shape index: {}]
  %s7 = inlined_call_operand.hbm [shape: bf16[512,128], index: 7, kind: input, shape index: {}]
  %s8 = inlined_call_operand.vmem [shape: f32[1,128], index: 8, kind: input, shape index: {}]
  %s9 = inlined_call_operand.hbm [shape: f32[1,1,128], index: 9, kind: output, shape index: {}]
  %s10 = sld [smem:[#allocation0]]
  $region66: #{tpu_custom_call.1} parent=0
    _
  %s12 = ssub.s32 1, %s10
  %s13 = scalar_select 0, %s12, %s10
  %v14 = vstv %s6
  %15 = vst [vmem:[#allocation2] sm:$0x1] %v14
  $region1: #{tpu_custom_call.1} parent=0
    #allocation3 [shape = 'u8[16384]{0}', space=vmem, size = 0x4000, scoped, tag = 'input window, operand 0, single buffered']
    #allocation4 [shape = 's32[1]{0}', space=sflag, size = 0x4, scoped, tag = 'scoped memory for tpu_custom_call.1']
    #allocation5 [shape = 's32[1]{0}', space=sflag, size = 0x4, scoped, tag = 'scoped memory for tpu_custom_call.1']
    #allocation6 [shape = 'u8[1048576]{0}', space=vmem, size = 0x100000, scoped, tag = 'input window, operand 1, single buffered']
    #allocation7 [shape = 's32[1]{0}', space=sflag, size = 0x4, scoped, tag = 'scoped memory for tpu_custom_call.1']
    #allocation8 [shape = 'u8[2048]{0}', space=vmem, size = 0x800, scoped, tag = 'input window, operand 2, single buffered']
    #allocation9 [shape = 'u8[131072]{0}', space=vmem, size = 0x20000, scoped, tag = 'input window, operand 3, single buffered']
    #allocation10 [shape = 's32[1]{0}', space=sflag, size = 0x4, scoped, tag = 'scoped memory for tpu_custom_call.1']
    #allocation11 [shape = 'u8[131072]{0}', space=vmem, size = 0x20000, scoped, tag = 'input window, operand 7, single buffered']
    #allocation12 [shape = 'u8[512]{0}', space=vmem, size = 0x400, scoped, tag = 'output window, operand 0, single buffered']
    %16 = vsyncpa [#allocation4], 0
    %17 = vsyncpa [#allocation7], 0
    %18 = vsyncpa [#allocation10], 0
    %19 = vsyncpa [#allocation5], 0
    // Predicated region
    $region2: #{tpu_custom_call.1} parent=1 // pred_check
      _
    $region3: #{tpu_custom_call.1} parent=1 // pred_check_branch
      %21 = sbr.rel (0) target = $region5
    $region4: #{tpu_custom_call.1} parent=1 // pred_region
      %23 = vsyncadd [#allocation4], 0
      %s25 = sshll.u32 %s0, 4
      %s26 = int_to_ptr.hbm [resolvable:$true] %s25
      %s27 = sshll.u32 [#allocation3], 4
      %s28 = int_to_ptr.vmem [resolvable:$true] %s27
      %30 = dma.hbm_to_vmem [thread:$0]  %s26, 512, %s28, [#allocation4]
    $region5: #{tpu_custom_call.1} parent=1 // pred_fallthru
      _
    // Predicated region
    $region6: #{tpu_custom_call.1} parent=1 // pred_check
      _
    $region7: #{tpu_custom_call.1} parent=1 // pred_check_branch
      %32 = sbr.rel (0) target = $region9
    $region8: #{tpu_custom_call.1} parent=1 // pred_region
      %34 = vsyncadd [#allocation7], 0
      %s35 = sshll.u32 %s1, 4
      %s36 = int_to_ptr.hbm [resolvable:$true] %s35
      %s37 = sshll.u32 [#allocation6], 4
      %s38 = int_to_ptr.vmem [resolvable:$true] %s37
      %43 = dma.hbm_to_vmem [thread:$0]  %s36, 32768, %s38, [#allocation7], 256, 256, 16
    $region9: #{tpu_custom_call.1} parent=1 // pred_fallthru
      _
    // Predicated region
    $region10: #{tpu_custom_call.1} parent=1 // pred_check
      _
    $region11: #{tpu_custom_call.1} parent=1 // pred_check_branch
      %45 = sbr.rel (0) target = $region13
    $region12: #{tpu_custom_call.1} parent=1 // pred_region
      %47 = vsyncadd [#allocation7], 0
      %s49 = sshll.u32 %s2, 4
      %s50 = int_to_ptr.hbm [resolvable:$true] %s49
      %s51 = sshll.u32 [#allocation8], 4
      %s52 = int_to_ptr.vmem [resolvable:$true] %s51
      %54 = dma.hbm_to_vmem [thread:$0]  %s50, 64, %s52, [#allocation7]
    $region13: #{tpu_custom_call.1} parent=1 // pred_fallthru
      _
    // Predicated region
    $region14: #{tpu_custom_call.1} parent=1 // pred_check
      _
    $region15: #{tpu_custom_call.1} parent=1 // pred_check_branch
      %56 = sbr.rel (0) target = $region17
    $region16: #{tpu_custom_call.1} parent=1 // pred_region
      %58 = vsyncadd [#allocation10], 0
      %s59 = sshll.u32 %s3, 4
      %s60 = int_to_ptr.hbm [resolvable:$true] %s59
      %s61 = sshll.u32 [#allocation9], 4
      %s62 = int_to_ptr.vmem [resolvable:$true] %s61
      %67 = dma.hbm_to_vmem [thread:$0]  %s60, 4096, %s62, [#allocation10], 64, 64, 4
    $region17: #{tpu_custom_call.1} parent=1 // pred_fallthru
      _
    // Predicated region
    $region18: #{tpu_custom_call.1} parent=1 // pred_check
      _
    $region19: #{tpu_custom_call.1} parent=1 // pred_check_branch
      %69 = sbr.rel (0) target = $region21
    $region20: #{tpu_custom_call.1} parent=1 // pred_region
      _
    $region21: #{tpu_custom_call.1} parent=1 // pred_fallthru
      _
    // Predicated region
    $region22: #{tpu_custom_call.1} parent=1 // pred_check
      _
    $region23: #{tpu_custom_call.1} parent=1 // pred_check_branch
      %71 = sbr.rel (0) target = $region25
    $region24: #{tpu_custom_call.1} parent=1 // pred_region
      _
    $region25: #{tpu_custom_call.1} parent=1 // pred_fallthru
      _
    // Predicated region
    $region26: #{tpu_custom_call.1} parent=1 // pred_check
      _
    $region27: #{tpu_custom_call.1} parent=1 // pred_check_branch
      %73 = sbr.rel (0) target = $region29
    $region28: #{tpu_custom_call.1} parent=1 // pred_region
      _
    $region29: #{tpu_custom_call.1} parent=1 // pred_fallthru
      _
    // Predicated region
    $region30: #{tpu_custom_call.1} parent=1 // pred_check
      _
    $region31: #{tpu_custom_call.1} parent=1 // pred_check_branch
      %75 = sbr.rel (0) target = $region33
    $region32: #{tpu_custom_call.1} parent=1 // pred_region
      %77 = vsyncadd [#allocation10], 0
      %s78 = sshll.u32 %s7, 4
      %s79 = int_to_ptr.hbm [resolvable:$true] %s78
      %s80 = sshll.u32 [#allocation11], 4
      %s81 = int_to_ptr.vmem [resolvable:$true] %s80
      %86 = dma.hbm_to_vmem [thread:$0]  %s79, 4096, %s81, [#allocation10], 64, 64, 4
    $region33: #{tpu_custom_call.1} parent=1 // pred_fallthru
      _
    // Predicated region
    $region34: #{tpu_custom_call.1} parent=1 // pred_check
      _
    $region35: #{tpu_custom_call.1} parent=1 // pred_check_branch
      %88 = sbr.rel (0) target = $region37
    $region36: #{tpu_custom_call.1} parent=1 // pred_region
      _
    $region37: #{tpu_custom_call.1} parent=1 // pred_fallthru
      _
    // Predicated region
    $region38: #{tpu_custom_call.1} parent=1 // pred_check
      _
    $region39: #{tpu_custom_call.1} parent=1 // pred_check_branch
      %90 = sbr.rel (0) target = $region41
    $region40: #{tpu_custom_call.1} parent=1 // pred_region
      %92 = dma.done [#allocation4], 512
    $region41: #{tpu_custom_call.1} parent=1 // pred_fallthru
      _
    // Predicated region
    $region42: #{tpu_custom_call.1} parent=1 // pred_check
      _
    $region43: #{tpu_custom_call.1} parent=1 // pred_check_branch
      %94 = sbr.rel (0) target = $region45
    $region44: #{tpu_custom_call.1} parent=1 // pred_region
      %96 = dma.done [#allocation7], 32768
    $region45: #{tpu_custom_call.1} parent=1 // pred_fallthru
      _
    // Predicated region
    $region46: #{tpu_custom_call.1} parent=1 // pred_check
      _
    $region47: #{tpu_custom_call.1} parent=1 // pred_check_branch
      %98 = sbr.rel (0) target = $region49
    $region48: #{tpu_custom_call.1} parent=1 // pred_region
      %100 = dma.done [#allocation7], 64
    $region49: #{tpu_custom_call.1} parent=1 // pred_fallthru
      _
    // Predicated region
    $region50: #{tpu_custom_call.1} parent=1 // pred_check
      _
    $region51: #{tpu_custom_call.1} parent=1 // pred_check_branch
      %102 = sbr.rel (0) target = $region53
    $region52: #{tpu_custom_call.1} parent=1 // pred_region
      %104 = dma.done [#allocation10], 4096
    $region53: #{tpu_custom_call.1} parent=1 // pred_fallthru
      _
    // Predicated region
    $region54: #{tpu_custom_call.1} parent=1 // pred_check
      _
    $region55: #{tpu_custom_call.1} parent=1 // pred_check_branch
      %106 = sbr.rel (0) target = $region57
    $region56: #{tpu_custom_call.1} parent=1 // pred_region
      %108 = dma.done [#allocation10], 4096
    $region57: #{tpu_custom_call.1} parent=1 // pred_fallthru
      _
    %v109 = vld [vmem:[#allocation3] sm:$0xff]
    %v110 = vld [vmem:[#allocation3 + $0x8] sm:$0xff]
    %v111 = vld [vmem:[#allocation3 + $0x10] sm:$0xff]
    %v112 = vld [vmem:[#allocation3 + $0x18] sm:$0xff]
    %v113 = vld [vmem:[#allocation6] sm:$0xff]
    %v114 = vld [vmem:[#allocation6 + $0x8] sm:$0xff]
    %v115 = vld [vmem:[#allocation6 + $0x10] sm:$0xff]
    %v116 = vld [vmem:[#allocation6 + $0x18] sm:$0xff]
    %v117 = vld [vmem:[#allocation6 + $0x20] sm:$0xff]
    %v118 = vld [vmem:[#allocation6 + $0x28] sm:$0xff]
    %v119 = vld [vmem:[#allocation6 + $0x30] sm:$0xff]
    %v120 = vld [vmem:[#allocation6 + $0x38] sm:$0xff]
    %v121 = vld [vmem:[#allocation6 + $0x40] sm:$0xff]
    %v122 = vld [vmem:[#allocation6 + $0x48] sm:$0xff]
    %v123 = vld [vmem:[#allocation6 + $0x50] sm:$0xff]
    %v124 = vld [vmem:[#allocation6 + $0x58] sm:$0xff]
    %v125 = vld [vmem:[#allocation6 + $0x60] sm:$0xff]
    %v126 = vld [vmem:[#allocation6 + $0x68] sm:$0xff]
    %v127 = vld [vmem:[#allocation6 + $0x70] sm:$0xff]
    %v128 = vld [vmem:[#allocation6 + $0x78] sm:$0xff]
    %v129 = vld [vmem:[#allocation6 + $0x80] sm:$0xff]
    %v130 = vld [vmem:[#allocation6 + $0x88] sm:$0xff]
    %v131 = vld [vmem:[#allocation6 + $0x90] sm:$0xff]
    %v132 = vld [vmem:[#allocation6 + $0x98] sm:$0xff]
    %v133 = vld [vmem:[#allocation6 + $0xa0] sm:$0xff]
    %v134 = vld [vmem:[#allocation6 + $0xa8] sm:$0xff]
    %v135 = vld [vmem:[#allocation6 + $0xb0] sm:$0xff]
    %v136 = vld [vmem:[#allocation6 + $0xb8] sm:$0xff]
    %v137 = vld [vmem:[#allocation6 + $0xc0] sm:$0xff]
    %v138 = vld [vmem:[#allocation6 + $0xc8] sm:$0xff]
    %v139 = vld [vmem:[#allocation6 + $0xd0] sm:$0xff]
    %v140 = vld [vmem:[#allocation6 + $0xd8] sm:$0xff]
    %v141 = vld [vmem:[#allocation6 + $0xe0] sm:$0xff]
    %v142 = vld [vmem:[#allocation6 + $0xe8] sm:$0xff]
    %v143 = vld [vmem:[#allocation6 + $0xf0] sm:$0xff]
    %v144 = vld [vmem:[#allocation6 + $0xf8] sm:$0xff]
    %v145 = vld [vmem:[#allocation6 + $0x100] sm:$0xff]
    %v146 = vld [vmem:[#allocation6 + $0x108] sm:$0xff]
    %v147 = vld [vmem:[#allocation6 + $0x110] sm:$0xff]
    %v148 = vld [vmem:[#allocation6 + $0x118] sm:$0xff]
    %v149 = vld [vmem:[#allocation6 + $0x120] sm:$0xff]
    %v150 = vld [vmem:[#allocation6 + $0x128] sm:$0xff]
    %v151 = vld [vmem:[#allocation6 + $0x130] sm:$0xff]
    %v152 = vld [vmem:[#allocation6 + $0x138] sm:$0xff]
    %v153 = vld [vmem:[#allocation6 + $0x140] sm:$0xff]
    %v154 = vld [vmem:[#allocation6 + $0x148] sm:$0xff]
    %v155 = vld [vmem:[#allocation6 + $0x150] sm:$0xff]
    %v156 = vld [vmem:[#allocation6 + $0x158] sm:$0xff]
    %v157 = vld [vmem:[#allocation6 + $0x160] sm:$0xff]
    %v158 = vld [vmem:[#allocation6 + $0x168] sm:$0xff]
    %v159 = vld [vmem:[#allocation6 + $0x170] sm:$0xff]
    %v160 = vld [vmem:[#allocation6 + $0x178] sm:$0xff]
    %v161 = vld [vmem:[#allocation6 + $0x180] sm:$0xff]
    %v162 = vld [vmem:[#allocation6 + $0x188] sm:$0xff]
    %v163 = vld [vmem:[#allocation6 + $0x190] sm:$0xff]
    %v164 = vld [vmem:[#allocation6 + $0x198] sm:$0xff]
    %v165 = vld [vmem:[#allocation6 + $0x1a0] sm:$0xff]
    %v166 = vld [vmem:[#allocation6 + $0x1a8] sm:$0xff]
    %v167 = vld [vmem:[#allocation6 + $0x1b0] sm:$0xff]
    %v168 = vld [vmem:[#allocation6 + $0x1b8] sm:$0xff]
    %v169 = vld [vmem:[#allocation6 + $0x1c0] sm:$0xff]
    %v170 = vld [vmem:[#allocation6 + $0x1c8] sm:$0xff]
    %v171 = vld [vmem:[#allocation6 + $0x1d0] sm:$0xff]
    %v172 = vld [vmem:[#allocation6 + $0x1d8] sm:$0xff]
    %v173 = vld [vmem:[#allocation6 + $0x1e0] sm:$0xff]
    %v174 = vld [vmem:[#allocation6 + $0x1e8] sm:$0xff]
    %v175 = vld [vmem:[#allocation6 + $0x1f0] sm:$0xff]
    %v176 = vld [vmem:[#allocation6 + $0x1f8] sm:$0xff]
    %v177 = vld [vmem:[#allocation6 + $0x200] sm:$0xff]
    %v178 = vld [vmem:[#allocation6 + $0x208] sm:$0xff]
    %v179 = vld [vmem:[#allocation6 + $0x210] sm:$0xff]
    %v180 = vld [vmem:[#allocation6 + $0x218] sm:$0xff]
    %v181 = vld [vmem:[#allocation6 + $0x220] sm:$0xff]
    %v182 = vld [vmem:[#allocation6 + $0x228] sm:$0xff]
    %v183 = vld [vmem:[#allocation6 + $0x230] sm:$0xff]
    %v184 = vld [vmem:[#allocation6 + $0x238] sm:$0xff]
    %v185 = vld [vmem:[#allocation6 + $0x240] sm:$0xff]
    %v186 = vld [vmem:[#allocation6 + $0x248] sm:$0xff]
    %v187 = vld [vmem:[#allocation6 + $0x250] sm:$0xff]
    %v188 = vld [vmem:[#allocation6 + $0x258] sm:$0xff]
    %v189 = vld [vmem:[#allocation6 + $0x260] sm:$0xff]
    %v190 = vld [vmem:[#allocation6 + $0x268] sm:$0xff]
    %v191 = vld [vmem:[#allocation6 + $0x270] sm:$0xff]
    %v192 = vld [vmem:[#allocation6 + $0x278] sm:$0xff]
    %v193 = vld [vmem:[#allocation6 + $0x280] sm:$0xff]
    %v194 = vld [vmem:[#allocation6 + $0x288] sm:$0xff]
    %v195 = vld [vmem:[#allocation6 + $0x290] sm:$0xff]
    %v196 = vld [vmem:[#allocation6 + $0x298] sm:$0xff]
    %v197 = vld [vmem:[#allocation6 + $0x2a0] sm:$0xff]
    %v198 = vld [vmem:[#allocation6 + $0x2a8] sm:$0xff]
    %v199 = vld [vmem:[#allocation6 + $0x2b0] sm:$0xff]
    %v200 = vld [vmem:[#allocation6 + $0x2b8] sm:$0xff]
    %v201 = vld [vmem:[#allocation6 + $0x2c0] sm:$0xff]
    %v202 = vld [vmem:[#allocation6 + $0x2c8] sm:$0xff]
    %v203 = vld [vmem:[#allocation6 + $0x2d0] sm:$0xff]
    %v204 = vld [vmem:[#allocation6 + $0x2d8] sm:$0xff]
    %v205 = vld [vmem:[#allocation6 + $0x2e0] sm:$0xff]
    %v206 = vld [vmem:[#allocation6 + $0x2e8] sm:$0xff]
    %v207 = vld [vmem:[#allocation6 + $0x2f0] sm:$0xff]
    %v208 = vld [vmem:[#allocation6 + $0x2f8] sm:$0xff]
    %v209 = vld [vmem:[#allocation6 + $0x300] sm:$0xff]
    %v210 = vld [vmem:[#allocation6 + $0x308] sm:$0xff]
    %v211 = vld [vmem:[#allocation6 + $0x310] sm:$0xff]
    %v212 = vld [vmem:[#allocation6 + $0x318] sm:$0xff]
    %v213 = vld [vmem:[#allocation6 + $0x320] sm:$0xff]
    %v214 = vld [vmem:[#allocation6 + $0x328] sm:$0xff]
    %v215 = vld [vmem:[#allocation6 + $0x330] sm:$0xff]
    %v216 = vld [vmem:[#allocation6 + $0x338] sm:$0xff]
    %v217 = vld [vmem:[#allocation6 + $0x340] sm:$0xff]
    %v218 = vld [vmem:[#allocation6 + $0x348] sm:$0xff]
    %v219 = vld [vmem:[#allocation6 + $0x350] sm:$0xff]
    %v220 = vld [vmem:[#allocation6 + $0x358] sm:$0xff]
    %v221 = vld [vmem:[#allocation6 + $0x360] sm:$0xff]
    %v222 = vld [vmem:[#allocation6 + $0x368] sm:$0xff]
    %v223 = vld [vmem:[#allocation6 + $0x370] sm:$0xff]
    %v224 = vld [vmem:[#allocation6 + $0x378] sm:$0xff]
    %v225 = vld [vmem:[#allocation6 + $0x380] sm:$0xff]
    %v226 = vld [vmem:[#allocation6 + $0x388] sm:$0xff]
    %v227 = vld [vmem:[#allocation6 + $0x390] sm:$0xff]
    %v228 = vld [vmem:[#allocation6 + $0x398] sm:$0xff]
    %v229 = vld [vmem:[#allocation6 + $0x3a0] sm:$0xff]
    %v230 = vld [vmem:[#allocation6 + $0x3a8] sm:$0xff]
    %v231 = vld [vmem:[#allocation6 + $0x3b0] sm:$0xff]
    %v232 = vld [vmem:[#allocation6 + $0x3b8] sm:$0xff]
    %v233 = vld [vmem:[#allocation6 + $0x3c0] sm:$0xff]
    %v234 = vld [vmem:[#allocation6 + $0x3c8] sm:$0xff]
    %v235 = vld [vmem:[#allocation6 + $0x3d0] sm:$0xff]
    %v236 = vld [vmem:[#allocation6 + $0x3d8] sm:$0xff]
    %v237 = vld [vmem:[#allocation6 + $0x3e0] sm:$0xff]
    %v238 = vld [vmem:[#allocation6 + $0x3e8] sm:$0xff]
    %v239 = vld [vmem:[#allocation6 + $0x3f0] sm:$0xff]
    %v240 = vld [vmem:[#allocation6 + $0x3f8] sm:$0xff]
    %v241 = vld [vmem:[#allocation6 + $0x400] sm:$0xff]
    %v242 = vld [vmem:[#allocation6 + $0x408] sm:$0xff]
    %v243 = vld [vmem:[#allocation6 + $0x410] sm:$0xff]
    %v244 = vld [vmem:[#allocation6 + $0x418] sm:$0xff]
    %v245 = vld [vmem:[#allocation6 + $0x420] sm:$0xff]
    %v246 = vld [vmem:[#allocation6 + $0x428] sm:$0xff]
    %v247 = vld [vmem:[#allocation6 + $0x430] sm:$0xff]
    %v248 = vld [vmem:[#allocation6 + $0x438] sm:$0xff]
    %v249 = vld [vmem:[#allocation6 + $0x440] sm:$0xff]
    %v250 = vld [vmem:[#allocation6 + $0x448] sm:$0xff]
    %v251 = vld [vmem:[#allocation6 + $0x450] sm:$0xff]
    %v252 = vld [vmem:[#allocation6 + $0x458] sm:$0xff]
    %v253 = vld [vmem:[#allocation6 + $0x460] sm:$0xff]
    %v254 = vld [vmem:[#allocation6 + $0x468] sm:$0xff]
    %v255 = vld [vmem:[#allocation6 + $0x470] sm:$0xff]
    %v256 = vld [vmem:[#allocation6 + $0x478] sm:$0xff]
    %v257 = vld [vmem:[#allocation6 + $0x480] sm:$0xff]
    %v258 = vld [vmem:[#allocation6 + $0x488] sm:$0xff]
    %v259 = vld [vmem:[#allocation6 + $0x490] sm:$0xff]
    %v260 = vld [vmem:[#allocation6 + $0x498] sm:$0xff]
    %v261 = vld [vmem:[#allocation6 + $0x4a0] sm:$0xff]
    %v262 = vld [vmem:[#allocation6 + $0x4a8] sm:$0xff]
    %v263 = vld [vmem:[#allocation6 + $0x4b0] sm:$0xff]
    %v264 = vld [vmem:[#allocation6 + $0x4b8] sm:$0xff]
    %v265 = vld [vmem:[#allocation6 + $0x4c0] sm:$0xff]
    %v266 = vld [vmem:[#allocation6 + $0x4c8] sm:$0xff]
    %v267 = vld [vmem:[#allocation6 + $0x4d0] sm:$0xff]
    %v268 = vld [vmem:[#allocation6 + $0x4d8] sm:$0xff]
    %v269 = vld [vmem:[#allocation6 + $0x4e0] sm:$0xff]
    %v270 = vld [vmem:[#allocation6 + $0x4e8] sm:$0xff]
    %v271 = vld [vmem:[#allocation6 + $0x4f0] sm:$0xff]
    %v272 = vld [vmem:[#allocation6 + $0x4f8] sm:$0xff]
    %v273 = vld [vmem:[#allocation6 + $0x500] sm:$0xff]
    %v274 = vld [vmem:[#allocation6 + $0x508] sm:$0xff]
    %v275 = vld [vmem:[#allocation6 + $0x510] sm:$0xff]
    %v276 = vld [vmem:[#allocation6 + $0x518] sm:$0xff]
    %v277 = vld [vmem:[#allocation6 + $0x520] sm:$0xff]
    %v278 = vld [vmem:[#allocation6 + $0x528] sm:$0xff]
    %v279 = vld [vmem:[#allocation6 + $0x530] sm:$0xff]
    %v280 = vld [vmem:[#allocation6 + $0x538] sm:$0xff]
    %v281 = vld [vmem:[#allocation6 + $0x540] sm:$0xff]
    %v282 = vld [vmem:[#allocation6 + $0x548] sm:$0xff]
    %v283 = vld [vmem:[#allocation6 + $0x550] sm:$0xff]
    %v284 = vld [vmem:[#allocation6 + $0x558] sm:$0xff]
    %v285 = vld [vmem:[#allocation6 + $0x560] sm:$0xff]
    %v286 = vld [vmem:[#allocation6 + $0x568] sm:$0xff]
    %v287 = vld [vmem:[#allocation6 + $0x570] sm:$0xff]
    %v288 = vld [vmem:[#allocation6 + $0x578] sm:$0xff]
    %v289 = vld [vmem:[#allocation6 + $0x580] sm:$0xff]
    %v290 = vld [vmem:[#allocation6 + $0x588] sm:$0xff]
    %v291 = vld [vmem:[#allocation6 + $0x590] sm:$0xff]
    %v292 = vld [vmem:[#allocation6 + $0x598] sm:$0xff]
    %v293 = vld [vmem:[#allocation6 + $0x5a0] sm:$0xff]
    %v294 = vld [vmem:[#allocation6 + $0x5a8] sm:$0xff]
    %v295 = vld [vmem:[#allocation6 + $0x5b0] sm:$0xff]
    %v296 = vld [vmem:[#allocation6 + $0x5b8] sm:$0xff]
    %v297 = vld [vmem:[#allocation6 + $0x5c0] sm:$0xff]
    %v298 = vld [vmem:[#allocation6 + $0x5c8] sm:$0xff]
    %v299 = vld [vmem:[#allocation6 + $0x5d0] sm:$0xff]
    %v300 = vld [vmem:[#allocation6 + $0x5d8] sm:$0xff]
    %v301 = vld [vmem:[#allocation6 + $0x5e0] sm:$0xff]
    %v302 = vld [vmem:[#allocation6 + $0x5e8] sm:$0xff]
    %v303 = vld [vmem:[#allocation6 + $0x5f0] sm:$0xff]
    %v304 = vld [vmem:[#allocation6 + $0x5f8] sm:$0xff]
    %v305 = vld [vmem:[#allocation6 + $0x600] sm:$0xff]
    %v306 = vld [vmem:[#allocation6 + $0x608] sm:$0xff]
    %v307 = vld [vmem:[#allocation6 + $0x610] sm:$0xff]
    %v308 = vld [vmem:[#allocation6 + $0x618] sm:$0xff]
    %v309 = vld [vmem:[#allocation6 + $0x620] sm:$0xff]
    %v310 = vld [vmem:[#allocation6 + $0x628] sm:$0xff]
    %v311 = vld [vmem:[#allocation6 + $0x630] sm:$0xff]
    %v312 = vld [vmem:[#allocation6 + $0x638] sm:$0xff]
    %v313 = vld [vmem:[#allocation6 + $0x640] sm:$0xff]
    %v314 = vld [vmem:[#allocation6 + $0x648] sm:$0xff]
    %v315 = vld [vmem:[#allocation6 + $0x650] sm:$0xff]
    %v316 = vld [vmem:[#allocation6 + $0x658] sm:$0xff]
    %v317 = vld [vmem:[#allocation6 + $0x660] sm:$0xff]
    %v318 = vld [vmem:[#allocation6 + $0x668] sm:$0xff]
    %v319 = vld [vmem:[#allocation6 + $0x670] sm:$0xff]
    %v320 = vld [vmem:[#allocation6 + $0x678] sm:$0xff]
    %v321 = vld [vmem:[#allocation6 + $0x680] sm:$0xff]
    %v322 = vld [vmem:[#allocation6 + $0x688] sm:$0xff]
    %v323 = vld [vmem:[#allocation6 + $0x690] sm:$0xff]
    %v324 = vld [vmem:[#allocation6 + $0x698] sm:$0xff]
    %v325 = vld [vmem:[#allocation6 + $0x6a0] sm:$0xff]
    %v326 = vld [vmem:[#allocation6 + $0x6a8] sm:$0xff]
    %v327 = vld [vmem:[#allocation6 + $0x6b0] sm:$0xff]
    %v328 = vld [vmem:[#allocation6 + $0x6b8] sm:$0xff]
    %v329 = vld [vmem:[#allocation6 + $0x6c0] sm:$0xff]
    %v330 = vld [vmem:[#allocation6 + $0x6c8] sm:$0xff]
    %v331 = vld [vmem:[#allocation6 + $0x6d0] sm:$0xff]
    %v332 = vld [vmem:[#allocation6 + $0x6d8] sm:$0xff]
    %v333 = vld [vmem:[#allocation6 + $0x6e0] sm:$0xff]
    %v334 = vld [vmem:[#allocation6 + $0x6e8] sm:$0xff]
    %v335 = vld [vmem:[#allocation6 + $0x6f0] sm:$0xff]
    %v336 = vld [vmem:[#allocation6 + $0x6f8] sm:$0xff]
    %v337 = vld [vmem:[#allocation6 + $0x700] sm:$0xff]
    %v338 = vld [vmem:[#allocation6 + $0x708] sm:$0xff]
    %v339 = vld [vmem:[#allocation6 + $0x710] sm:$0xff]
    %v340 = vld [vmem:[#allocation6 + $0x718] sm:$0xff]
    %v341 = vld [vmem:[#allocation6 + $0x720] sm:$0xff]
    %v342 = vld [vmem:[#allocation6 + $0x728] sm:$0xff]
    %v343 = vld [vmem:[#allocation6 + $0x730] sm:$0xff]
    %v344 = vld [vmem:[#allocation6 + $0x738] sm:$0xff]
    %v345 = vld [vmem:[#allocation6 + $0x740] sm:$0xff]
    %v346 = vld [vmem:[#allocation6 + $0x748] sm:$0xff]
    %v347 = vld [vmem:[#allocation6 + $0x750] sm:$0xff]
    %v348 = vld [vmem:[#allocation6 + $0x758] sm:$0xff]
    %v349 = vld [vmem:[#allocation6 + $0x760] sm:$0xff]
    %v350 = vld [vmem:[#allocation6 + $0x768] sm:$0xff]
    %v351 = vld [vmem:[#allocation6 + $0x770] sm:$0xff]
    %v352 = vld [vmem:[#allocation6 + $0x778] sm:$0xff]
    %v353 = vld [vmem:[#allocation6 + $0x780] sm:$0xff]
    %v354 = vld [vmem:[#allocation6 + $0x788] sm:$0xff]
    %v355 = vld [vmem:[#allocation6 + $0x790] sm:$0xff]
    %v356 = vld [vmem:[#allocation6 + $0x798] sm:$0xff]
    %v357 = vld [vmem:[#allocation6 + $0x7a0] sm:$0xff]
    %v358 = vld [vmem:[#allocation6 + $0x7a8] sm:$0xff]
    %v359 = vld [vmem:[#allocation6 + $0x7b0] sm:$0xff]
    %v360 = vld [vmem:[#allocation6 + $0x7b8] sm:$0xff]
    %v361 = vld [vmem:[#allocation6 + $0x7c0] sm:$0xff]
    %v362 = vld [vmem:[#allocation6 + $0x7c8] sm:$0xff]
    %v363 = vld [vmem:[#allocation6 + $0x7d0] sm:$0xff]
    %v364 = vld [vmem:[#allocation6 + $0x7d8] sm:$0xff]
    %v365 = vld [vmem:[#allocation6 + $0x7e0] sm:$0xff]
    %v366 = vld [vmem:[#allocation6 + $0x7e8] sm:$0xff]
    %v367 = vld [vmem:[#allocation6 + $0x7f0] sm:$0xff]
    %v368 = vld [vmem:[#allocation6 + $0x7f8] sm:$0xff]
    %v369 = vld [vmem:[#allocation8] sm:$0xf]
    %v371 = vperm.slane %v369, 0
    %v372 = vperm.slane %v369, 1
    %v373 = vperm.slane %v369, 2
    %v374 = vperm.slane %v369, 3
    %v383 = vunpack.c.l.b16 %v109
    %v384 = vunpack.c.h.b16 %v109
    %v385 = vunpack.c.l.b16 %v110
    %v386 = vunpack.c.h.b16 %v110
    %v387 = vunpack.c.l.b16 %v111
    %v388 = vunpack.c.h.b16 %v111
    %v389 = vunpack.c.l.b16 %v112
    %v390 = vunpack.c.h.b16 %v112
    %v391 = vpack.c.b16 %v383, %v383
    %v392 = vpack.c.b16 %v384, %v384
    %v393 = vpack.c.b16 %v385, %v385
    %v394 = vpack.c.b16 %v386, %v386
    %v395 = vpack.c.b16 %v387, %v387
    %v396 = vpack.c.b16 %v388, %v388
    %v397 = vpack.c.b16 %v389, %v389
    %v398 = vpack.c.b16 %v390, %v390
    %v663 = vunpack.c.l.b16 %v113
    %v664 = vunpack.c.h.b16 %v113
    %v665 = vunpack.c.l.b16 %v114
    %v666 = vunpack.c.h.b16 %v114
    %v667 = vunpack.c.l.b16 %v115
    %v668 = vunpack.c.h.b16 %v115
    %v669 = vunpack.c.l.b16 %v116
    %v670 = vunpack.c.h.b16 %v116
    %v671 = vunpack.c.l.b16 %v117
    %v672 = vunpack.c.h.b16 %v117
    %v673 = vunpack.c.l.b16 %v118
    %v674 = vunpack.c.h.b16 %v118
    %v675 = vunpack.c.l.b16 %v119
    %v676 = vunpack.c.h.b16 %v119
    %v677 = vunpack.c.l.b16 %v120
    %v678 = vunpack.c.h.b16 %v120
    %v679 = vunpack.c.l.b16 %v121
    %v680 = vunpack.c.h.b16 %v121
    %v681 = vunpack.c.l.b16 %v122
    %v682 = vunpack.c.h.b16 %v122
    %v683 = vunpack.c.l.b16 %v123
    %v684 = vunpack.c.h.b16 %v123
    %v685 = vunpack.c.l.b16 %v124
    %v686 = vunpack.c.h.b16 %v124
    %v687 = vunpack.c.l.b16 %v125
    %v688 = vunpack.c.h.b16 %v125
    %v689 = vunpack.c.l.b16 %v126
    %v690 = vunpack.c.h.b16 %v126
    %v691 = vunpack.c.l.b16 %v127
    %v692 = vunpack.c.h.b16 %v127
    %v693 = vunpack.c.l.b16 %v128
    %v694 = vunpack.c.h.b16 %v128
    %v695 = vunpack.c.l.b16 %v129
    %v696 = vunpack.c.h.b16 %v129
    %v697 = vunpack.c.l.b16 %v130
    %v698 = vunpack.c.h.b16 %v130
    %v699 = vunpack.c.l.b16 %v131
    %v700 = vunpack.c.h.b16 %v131
    %v701 = vunpack.c.l.b16 %v132
    %v702 = vunpack.c.h.b16 %v132
    %v703 = vunpack.c.l.b16 %v133
    %v704 = vunpack.c.h.b16 %v133
    %v705 = vunpack.c.l.b16 %v134
    %v706 = vunpack.c.h.b16 %v134
    %v707 = vunpack.c.l.b16 %v135
    %v708 = vunpack.c.h.b16 %v135
    %v709 = vunpack.c.l.b16 %v136
    %v710 = vunpack.c.h.b16 %v136
    %v711 = vunpack.c.l.b16 %v137
    %v712 = vunpack.c.h.b16 %v137
    %v713 = vunpack.c.l.b16 %v138
    %v714 = vunpack.c.h.b16 %v138
    %v715 = vunpack.c.l.b16 %v139
    %v716 = vunpack.c.h.b16 %v139
    %v717 = vunpack.c.l.b16 %v140
    %v718 = vunpack.c.h.b16 %v140
    %v719 = vunpack.c.l.b16 %v141
    %v720 = vunpack.c.h.b16 %v141
    %v721 = vunpack.c.l.b16 %v142
    %v722 = vunpack.c.h.b16 %v142
    %v723 = vunpack.c.l.b16 %v143
    %v724 = vunpack.c.h.b16 %v143
    %v725 = vunpack.c.l.b16 %v144
    %v726 = vunpack.c.h.b16 %v144
    %v727 = vunpack.c.l.b16 %v145
    %v728 = vunpack.c.h.b16 %v145
    %v729 = vunpack.c.l.b16 %v146
    %v730 = vunpack.c.h.b16 %v146
    %v731 = vunpack.c.l.b16 %v147
    %v732 = vunpack.c.h.b16 %v147
    %v733 = vunpack.c.l.b16 %v148
    %v734 = vunpack.c.h.b16 %v148
    %v735 = vunpack.c.l.b16 %v149
    %v736 = vunpack.c.h.b16 %v149
    %v737 = vunpack.c.l.b16 %v150
    %v738 = vunpack.c.h.b16 %v150
    %v739 = vunpack.c.l.b16 %v151
    %v740 = vunpack.c.h.b16 %v151
    %v741 = vunpack.c.l.b16 %v152
    %v742 = vunpack.c.h.b16 %v152
    %v743 = vunpack.c.l.b16 %v153
    %v744 = vunpack.c.h.b16 %v153
    %v745 = vunpack.c.l.b16 %v154
    %v746 = vunpack.c.h.b16 %v154
    %v747 = vunpack.c.l.b16 %v155
    %v748 = vunpack.c.h.b16 %v155
    %v749 = vunpack.c.l.b16 %v156
    %v750 = vunpack.c.h.b16 %v156
    %v751 = vunpack.c.l.b16 %v157
    %v752 = vunpack.c.h.b16 %v157
    %v753 = vunpack.c.l.b16 %v158
    %v754 = vunpack.c.h.b16 %v158
    %v755 = vunpack.c.l.b16 %v159
    %v756 = vunpack.c.h.b16 %v159
    %v757 = vunpack.c.l.b16 %v160
    %v758 = vunpack.c.h.b16 %v160
    %v759 = vunpack.c.l.b16 %v161
    %v760 = vunpack.c.h.b16 %v161
    %v761 = vunpack.c.l.b16 %v162
    %v762 = vunpack.c.h.b16 %v162
    %v763 = vunpack.c.l.b16 %v163
    %v764 = vunpack.c.h.b16 %v163
    %v765 = vunpack.c.l.b16 %v164
    %v766 = vunpack.c.h.b16 %v164
    %v767 = vunpack.c.l.b16 %v165
    %v768 = vunpack.c.h.b16 %v165
    %v769 = vunpack.c.l.b16 %v166
    %v770 = vunpack.c.h.b16 %v166
    %v771 = vunpack.c.l.b16 %v167
    %v772 = vunpack.c.h.b16 %v167
    %v773 = vunpack.c.l.b16 %v168
    %v774 = vunpack.c.h.b16 %v168
    %v775 = vunpack.c.l.b16 %v169
    %v776 = vunpack.c.h.b16 %v169
    %v777 = vunpack.c.l.b16 %v170
    %v778 = vunpack.c.h.b16 %v170
    %v779 = vunpack.c.l.b16 %v171
    %v780 = vunpack.c.h.b16 %v171
    %v781 = vunpack.c.l.b16 %v172
    %v782 = vunpack.c.h.b16 %v172
    %v783 = vunpack.c.l.b16 %v173
    %v784 = vunpack.c.h.b16 %v173
    %v785 = vunpack.c.l.b16 %v174
    %v786 = vunpack.c.h.b16 %v174
    %v787 = vunpack.c.l.b16 %v175
    %v788 = vunpack.c.h.b16 %v175
    %v789 = vunpack.c.l.b16 %v176
    %v790 = vunpack.c.h.b16 %v176
    %v791 = vunpack.c.l.b16 %v177
    %v792 = vunpack.c.h.b16 %v177
    %v793 = vunpack.c.l.b16 %v178
    %v794 = vunpack.c.h.b16 %v178
    %v795 = vunpack.c.l.b16 %v179
    %v796 = vunpack.c.h.b16 %v179
    %v797 = vunpack.c.l.b16 %v180
    %v798 = vunpack.c.h.b16 %v180
    %v799 = vunpack.c.l.b16 %v181
    %v800 = vunpack.c.h.b16 %v181
    %v801 = vunpack.c.l.b16 %v182
    %v802 = vunpack.c.h.b16 %v182
    %v803 = vunpack.c.l.b16 %v183
    %v804 = vunpack.c.h.b16 %v183
    %v805 = vunpack.c.l.b16 %v184
    %v806 = vunpack.c.h.b16 %v184
    %v807 = vunpack.c.l.b16 %v185
    %v808 = vunpack.c.h.b16 %v185
    %v809 = vunpack.c.l.b16 %v186
    %v810 = vunpack.c.h.b16 %v186
    %v811 = vunpack.c.l.b16 %v187
    %v812 = vunpack.c.h.b16 %v187
    %v813 = vunpack.c.l.b16 %v188
    %v814 = vunpack.c.h.b16 %v188
    %v815 = vunpack.c.l.b16 %v189
    %v816 = vunpack.c.h.b16 %v189
    %v817 = vunpack.c.l.b16 %v190
    %v818 = vunpack.c.h.b16 %v190
    %v819 = vunpack.c.l.b16 %v191
    %v820 = vunpack.c.h.b16 %v191
    %v821 = vunpack.c.l.b16 %v192
    %v822 = vunpack.c.h.b16 %v192
    %v823 = vunpack.c.l.b16 %v193
    %v824 = vunpack.c.h.b16 %v193
    %v825 = vunpack.c.l.b16 %v194
    %v826 = vunpack.c.h.b16 %v194
    %v827 = vunpack.c.l.b16 %v195
    %v828 = vunpack.c.h.b16 %v195
    %v829 = vunpack.c.l.b16 %v196
    %v830 = vunpack.c.h.b16 %v196
    %v831 = vunpack.c.l.b16 %v197
    %v832 = vunpack.c.h.b16 %v197
    %v833 = vunpack.c.l.b16 %v198
    %v834 = vunpack.c.h.b16 %v198
    %v835 = vunpack.c.l.b16 %v199
    %v836 = vunpack.c.h.b16 %v199
    %v837 = vunpack.c.l.b16 %v200
    %v838 = vunpack.c.h.b16 %v200
    %v839 = vunpack.c.l.b16 %v201
    %v840 = vunpack.c.h.b16 %v201
    %v841 = vunpack.c.l.b16 %v202
    %v842 = vunpack.c.h.b16 %v202
    %v843 = vunpack.c.l.b16 %v203
    %v844 = vunpack.c.h.b16 %v203
    %v845 = vunpack.c.l.b16 %v204
    %v846 = vunpack.c.h.b16 %v204
    %v847 = vunpack.c.l.b16 %v205
    %v848 = vunpack.c.h.b16 %v205
    %v849 = vunpack.c.l.b16 %v206
    %v850 = vunpack.c.h.b16 %v206
    %v851 = vunpack.c.l.b16 %v207
    %v852 = vunpack.c.h.b16 %v207
    %v853 = vunpack.c.l.b16 %v208
    %v854 = vunpack.c.h.b16 %v208
    %v855 = vunpack.c.l.b16 %v209
    %v856 = vunpack.c.h.b16 %v209
    %v857 = vunpack.c.l.b16 %v210
    %v858 = vunpack.c.h.b16 %v210
    %v859 = vunpack.c.l.b16 %v211
    %v860 = vunpack.c.h.b16 %v211
    %v861 = vunpack.c.l.b16 %v212
    %v862 = vunpack.c.h.b16 %v212
    %v863 = vunpack.c.l.b16 %v213
    %v864 = vunpack.c.h.b16 %v213
    %v865 = vunpack.c.l.b16 %v214
    %v866 = vunpack.c.h.b16 %v214
    %v867 = vunpack.c.l.b16 %v215
    %v868 = vunpack.c.h.b16 %v215
    %v869 = vunpack.c.l.b16 %v216
    %v870 = vunpack.c.h.b16 %v216
    %v871 = vunpack.c.l.b16 %v217
    %v872 = vunpack.c.h.b16 %v217
    %v873 = vunpack.c.l.b16 %v218
    %v874 = vunpack.c.h.b16 %v218
    %v875 = vunpack.c.l.b16 %v219
    %v876 = vunpack.c.h.b16 %v219
    %v877 = vunpack.c.l.b16 %v220
    %v878 = vunpack.c.h.b16 %v220
    %v879 = vunpack.c.l.b16 %v221
    %v880 = vunpack.c.h.b16 %v221
    %v881 = vunpack.c.l.b16 %v222
    %v882 = vunpack.c.h.b16 %v222
    %v883 = vunpack.c.l.b16 %v223
    %v884 = vunpack.c.h.b16 %v223
    %v885 = vunpack.c.l.b16 %v224
    %v886 = vunpack.c.h.b16 %v224
    %v887 = vunpack.c.l.b16 %v225
    %v888 = vunpack.c.h.b16 %v225
    %v889 = vunpack.c.l.b16 %v226
    %v890 = vunpack.c.h.b16 %v226
    %v891 = vunpack.c.l.b16 %v227
    %v892 = vunpack.c.h.b16 %v227
    %v893 = vunpack.c.l.b16 %v228
    %v894 = vunpack.c.h.b16 %v228
    %v895 = vunpack.c.l.b16 %v229
    %v896 = vunpack.c.h.b16 %v229
    %v897 = vunpack.c.l.b16 %v230
    %v898 = vunpack.c.h.b16 %v230
    %v899 = vunpack.c.l.b16 %v231
    %v900 = vunpack.c.h.b16 %v231
    %v901 = vunpack.c.l.b16 %v232
    %v902 = vunpack.c.h.b16 %v232
    %v903 = vunpack.c.l.b16 %v233
    %v904 = vunpack.c.h.b16 %v233
    %v905 = vunpack.c.l.b16 %v234
    %v906 = vunpack.c.h.b16 %v234
    %v907 = vunpack.c.l.b16 %v235
    %v908 = vunpack.c.h.b16 %v235
    %v909 = vunpack.c.l.b16 %v236
    %v910 = vunpack.c.h.b16 %v236
    %v911 = vunpack.c.l.b16 %v237
    %v912 = vunpack.c.h.b16 %v237
    %v913 = vunpack.c.l.b16 %v238
    %v914 = vunpack.c.h.b16 %v238
    %v915 = vunpack.c.l.b16 %v239
    %v916 = vunpack.c.h.b16 %v239
    %v917 = vunpack.c.l.b16 %v240
    %v918 = vunpack.c.h.b16 %v240
    %v919 = vunpack.c.l.b16 %v241
    %v920 = vunpack.c.h.b16 %v241
    %v921 = vunpack.c.l.b16 %v242
    %v922 = vunpack.c.h.b16 %v242
    %v923 = vunpack.c.l.b16 %v243
    %v924 = vunpack.c.h.b16 %v243
    %v925 = vunpack.c.l.b16 %v244
    %v926 = vunpack.c.h.b16 %v244
    %v927 = vunpack.c.l.b16 %v245
    %v928 = vunpack.c.h.b16 %v245
    %v929 = vunpack.c.l.b16 %v246
    %v930 = vunpack.c.h.b16 %v246
    %v931 = vunpack.c.l.b16 %v247
    %v932 = vunpack.c.h.b16 %v247
    %v933 = vunpack.c.l.b16 %v248
    %v934 = vunpack.c.h.b16 %v248
    %v935 = vunpack.c.l.b16 %v249
    %v936 = vunpack.c.h.b16 %v249
    %v937 = vunpack.c.l.b16 %v250
    %v938 = vunpack.c.h.b16 %v250
    %v939 = vunpack.c.l.b16 %v251
    %v940 = vunpack.c.h.b16 %v251
    %v941 = vunpack.c.l.b16 %v252
    %v942 = vunpack.c.h.b16 %v252
    %v943 = vunpack.c.l.b16 %v253
    %v944 = vunpack.c.h.b16 %v253
    %v945 = vunpack.c.l.b16 %v254
    %v946 = vunpack.c.h.b16 %v254
    %v947 = vunpack.c.l.b16 %v255
    %v948 = vunpack.c.h.b16 %v255
    %v949 = vunpack.c.l.b16 %v256
    %v950 = vunpack.c.h.b16 %v256
    %v951 = vunpack.c.l.b16 %v257
    %v952 = vunpack.c.h.b16 %v257
    %v953 = vunpack.c.l.b16 %v258
    %v954 = vunpack.c.h.b16 %v258
    %v955 = vunpack.c.l.b16 %v259
    %v956 = vunpack.c.h.b16 %v259
    %v957 = vunpack.c.l.b16 %v260
    %v958 = vunpack.c.h.b16 %v260
    %v959 = vunpack.c.l.b16 %v261
    %v960 = vunpack.c.h.b16 %v261
    %v961 = vunpack.c.l.b16 %v262
    %v962 = vunpack.c.h.b16 %v262
    %v963 = vunpack.c.l.b16 %v263
    %v964 = vunpack.c.h.b16 %v263
    %v965 = vunpack.c.l.b16 %v264
    %v966 = vunpack.c.h.b16 %v264
    %v967 = vunpack.c.l.b16 %v265
    %v968 = vunpack.c.h.b16 %v265
    %v969 = vunpack.c.l.b16 %v266
    %v970 = vunpack.c.h.b16 %v266
    %v971 = vunpack.c.l.b16 %v267
    %v972 = vunpack.c.h.b16 %v267
    %v973 = vunpack.c.l.b16 %v268
    %v974 = vunpack.c.h.b16 %v268
    %v975 = vunpack.c.l.b16 %v269
    %v976 = vunpack.c.h.b16 %v269
    %v977 = vunpack.c.l.b16 %v270
    %v978 = vunpack.c.h.b16 %v270
    %v979 = vunpack.c.l.b16 %v271
    %v980 = vunpack.c.h.b16 %v271
    %v981 = vunpack.c.l.b16 %v272
    %v982 = vunpack.c.h.b16 %v272
    %v983 = vunpack.c.l.b16 %v273
    %v984 = vunpack.c.h.b16 %v273
    %v985 = vunpack.c.l.b16 %v274
    %v986 = vunpack.c.h.b16 %v274
    %v987 = vunpack.c.l.b16 %v275
    %v988 = vunpack.c.h.b16 %v275
    %v989 = vunpack.c.l.b16 %v276
    %v990 = vunpack.c.h.b16 %v276
    %v991 = vunpack.c.l.b16 %v277
    %v992 = vunpack.c.h.b16 %v277
    %v993 = vunpack.c.l.b16 %v278
    %v994 = vunpack.c.h.b16 %v278
    %v995 = vunpack.c.l.b16 %v279
    %v996 = vunpack.c.h.b16 %v279
    %v997 = vunpack.c.l.b16 %v280
    %v998 = vunpack.c.h.b16 %v280
    %v999 = vunpack.c.l.b16 %v281
    %v1000 = vunpack.c.h.b16 %v281
    %v1001 = vunpack.c.l.b16 %v282
    %v1002 = vunpack.c.h.b16 %v282
    %v1003 = vunpack.c.l.b16 %v283
    %v1004 = vunpack.c.h.b16 %v283
    %v1005 = vunpack.c.l.b16 %v284
    %v1006 = vunpack.c.h.b16 %v284
    %v1007 = vunpack.c.l.b16 %v285
    %v1008 = vunpack.c.h.b16 %v285
    %v1009 = vunpack.c.l.b16 %v286
    %v1010 = vunpack.c.h.b16 %v286
    %v1011 = vunpack.c.l.b16 %v287
    %v1012 = vunpack.c.h.b16 %v287
    %v1013 = vunpack.c.l.b16 %v288
    %v1014 = vunpack.c.h.b16 %v288
    %v1015 = vunpack.c.l.b16 %v289
    %v1016 = vunpack.c.h.b16 %v289
    %v1017 = vunpack.c.l.b16 %v290
    %v1018 = vunpack.c.h.b16 %v290
    %v1019 = vunpack.c.l.b16 %v291
    %v1020 = vunpack.c.h.b16 %v291
    %v1021 = vunpack.c.l.b16 %v292
    %v1022 = vunpack.c.h.b16 %v292
    %v1023 = vunpack.c.l.b16 %v293
    %v1024 = vunpack.c.h.b16 %v293
    %v1025 = vunpack.c.l.b16 %v294
    %v1026 = vunpack.c.h.b16 %v294
    %v1027 = vunpack.c.l.b16 %v295
    %v1028 = vunpack.c.h.b16 %v295
    %v1029 = vunpack.c.l.b16 %v296
    %v1030 = vunpack.c.h.b16 %v296
    %v1031 = vunpack.c.l.b16 %v297
    %v1032 = vunpack.c.h.b16 %v297
    %v1033 = vunpack.c.l.b16 %v298
    %v1034 = vunpack.c.h.b16 %v298
    %v1035 = vunpack.c.l.b16 %v299
    %v1036 = vunpack.c.h.b16 %v299
    %v1037 = vunpack.c.l.b16 %v300
    %v1038 = vunpack.c.h.b16 %v300
    %v1039 = vunpack.c.l.b16 %v301
    %v1040 = vunpack.c.h.b16 %v301
    %v1041 = vunpack.c.l.b16 %v302
    %v1042 = vunpack.c.h.b16 %v302
    %v1043 = vunpack.c.l.b16 %v303
    %v1044 = vunpack.c.h.b16 %v303
    %v1045 = vunpack.c.l.b16 %v304
    %v1046 = vunpack.c.h.b16 %v304
    %v1047 = vunpack.c.l.b16 %v305
    %v1048 = vunpack.c.h.b16 %v305
    %v1049 = vunpack.c.l.b16 %v306
    %v1050 = vunpack.c.h.b16 %v306
    %v1051 = vunpack.c.l.b16 %v307
    %v1052 = vunpack.c.h.b16 %v307
    %v1053 = vunpack.c.l.b16 %v308
    %v1054 = vunpack.c.h.b16 %v308
    %v1055 = vunpack.c.l.b16 %v309
    %v1056 = vunpack.c.h.b16 %v309
    %v1057 = vunpack.c.l.b16 %v310
    %v1058 = vunpack.c.h.b16 %v310
    %v1059 = vunpack.c.l.b16 %v311
    %v1060 = vunpack.c.h.b16 %v311
    %v1061 = vunpack.c.l.b16 %v312
    %v1062 = vunpack.c.h.b16 %v312
    %v1063 = vunpack.c.l.b16 %v313
    %v1064 = vunpack.c.h.b16 %v313
    %v1065 = vunpack.c.l.b16 %v314
    %v1066 = vunpack.c.h.b16 %v314
    %v1067 = vunpack.c.l.b16 %v315
    %v1068 = vunpack.c.h.b16 %v315
    %v1069 = vunpack.c.l.b16 %v316
    %v1070 = vunpack.c.h.b16 %v316
    %v1071 = vunpack.c.l.b16 %v317
    %v1072 = vunpack.c.h.b16 %v317
    %v1073 = vunpack.c.l.b16 %v318
    %v1074 = vunpack.c.h.b16 %v318
    %v1075 = vunpack.c.l.b16 %v319
    %v1076 = vunpack.c.h.b16 %v319
    %v1077 = vunpack.c.l.b16 %v320
    %v1078 = vunpack.c.h.b16 %v320
    %v1079 = vunpack.c.l.b16 %v321
    %v1080 = vunpack.c.h.b16 %v321
    %v1081 = vunpack.c.l.b16 %v322
    %v1082 = vunpack.c.h.b16 %v322
    %v1083 = vunpack.c.l.b16 %v323
    %v1084 = vunpack.c.h.b16 %v323
    %v1085 = vunpack.c.l.b16 %v324
    %v1086 = vunpack.c.h.b16 %v324
    %v1087 = vunpack.c.l.b16 %v325
    %v1088 = vunpack.c.h.b16 %v325
    %v1089 = vunpack.c.l.b16 %v326
    %v1090 = vunpack.c.h.b16 %v326
    %v1091 = vunpack.c.l.b16 %v327
    %v1092 = vunpack.c.h.b16 %v327
    %v1093 = vunpack.c.l.b16 %v328
    %v1094 = vunpack.c.h.b16 %v328
    %v1095 = vunpack.c.l.b16 %v329
    %v1096 = vunpack.c.h.b16 %v329
    %v1097 = vunpack.c.l.b16 %v330
    %v1098 = vunpack.c.h.b16 %v330
    %v1099 = vunpack.c.l.b16 %v331
    %v1100 = vunpack.c.h.b16 %v331
    %v1101 = vunpack.c.l.b16 %v332
    %v1102 = vunpack.c.h.b16 %v332
    %v1103 = vunpack.c.l.b16 %v333
    %v1104 = vunpack.c.h.b16 %v333
    %v1105 = vunpack.c.l.b16 %v334
    %v1106 = vunpack.c.h.b16 %v334
    %v1107 = vunpack.c.l.b16 %v335
    %v1108 = vunpack.c.h.b16 %v335
    %v1109 = vunpack.c.l.b16 %v336
    %v1110 = vunpack.c.h.b16 %v336
    %v1111 = vunpack.c.l.b16 %v337
    %v1112 = vunpack.c.h.b16 %v337
    %v1113 = vunpack.c.l.b16 %v338
    %v1114 = vunpack.c.h.b16 %v338
    %v1115 = vunpack.c.l.b16 %v339
    %v1116 = vunpack.c.h.b16 %v339
    %v1117 = vunpack.c.l.b16 %v340
    %v1118 = vunpack.c.h.b16 %v340
    %v1119 = vunpack.c.l.b16 %v341
    %v1120 = vunpack.c.h.b16 %v341
    %v1121 = vunpack.c.l.b16 %v342
    %v1122 = vunpack.c.h.b16 %v342
    %v1123 = vunpack.c.l.b16 %v343
    %v1124 = vunpack.c.h.b16 %v343
    %v1125 = vunpack.c.l.b16 %v344
    %v1126 = vunpack.c.h.b16 %v344
    %v1127 = vunpack.c.l.b16 %v345
    %v1128 = vunpack.c.h.b16 %v345
    %v1129 = vunpack.c.l.b16 %v346
    %v1130 = vunpack.c.h.b16 %v346
    %v1131 = vunpack.c.l.b16 %v347
    %v1132 = vunpack.c.h.b16 %v347
    %v1133 = vunpack.c.l.b16 %v348
    %v1134 = vunpack.c.h.b16 %v348
    %v1135 = vunpack.c.l.b16 %v349
    %v1136 = vunpack.c.h.b16 %v349
    %v1137 = vunpack.c.l.b16 %v350
    %v1138 = vunpack.c.h.b16 %v350
    %v1139 = vunpack.c.l.b16 %v351
    %v1140 = vunpack.c.h.b16 %v351
    %v1141 = vunpack.c.l.b16 %v352
    %v1142 = vunpack.c.h.b16 %v352
    %v1143 = vunpack.c.l.b16 %v353
    %v1144 = vunpack.c.h.b16 %v353
    %v1145 = vunpack.c.l.b16 %v354
    %v1146 = vunpack.c.h.b16 %v354
    %v1147 = vunpack.c.l.b16 %v355
    %v1148 = vunpack.c.h.b16 %v355
    %v1149 = vunpack.c.l.b16 %v356
    %v1150 = vunpack.c.h.b16 %v356
    %v1151 = vunpack.c.l.b16 %v357
    %v1152 = vunpack.c.h.b16 %v357
    %v1153 = vunpack.c.l.b16 %v358
    %v1154 = vunpack.c.h.b16 %v358
    %v1155 = vunpack.c.l.b16 %v359
    %v1156 = vunpack.c.h.b16 %v359
    %v1157 = vunpack.c.l.b16 %v360
    %v1158 = vunpack.c.h.b16 %v360
    %v1159 = vunpack.c.l.b16 %v361
    %v1160 = vunpack.c.h.b16 %v361
    %v1161 = vunpack.c.l.b16 %v362
    %v1162 = vunpack.c.h.b16 %v362
    %v1163 = vunpack.c.l.b16 %v363
    %v1164 = vunpack.c.h.b16 %v363
    %v1165 = vunpack.c.l.b16 %v364
    %v1166 = vunpack.c.h.b16 %v364
    %v1167 = vunpack.c.l.b16 %v365
    %v1168 = vunpack.c.h.b16 %v365
    %v1169 = vunpack.c.l.b16 %v366
    %v1170 = vunpack.c.h.b16 %v366
    %v1171 = vunpack.c.l.b16 %v367
    %v1172 = vunpack.c.h.b16 %v367
    %v1173 = vunpack.c.l.b16 %v368
    %v1174 = vunpack.c.h.b16 %v368
    %v1175 = vpack.c.b16 %v667, %v663
    %v1176 = vpack.c.b16 %v668, %v664
    %v1177 = vpack.c.b16 %v669, %v665
    %v1178 = vpack.c.b16 %v670, %v666
    %v1179 = vpack.c.b16 %v675, %v671
    %v1180 = vpack.c.b16 %v676, %v672
    %v1181 = vpack.c.b16 %v677, %v673
    %v1182 = vpack.c.b16 %v678, %v674
    %v1183 = vpack.c.b16 %v683, %v679
    %v1184 = vpack.c.b16 %v684, %v680
    %v1185 = vpack.c.b16 %v685, %v681
    %v1186 = vpack.c.b16 %v686, %v682
    %v1187 = vpack.c.b16 %v691, %v687
    %v1188 = vpack.c.b16 %v692, %v688
    %v1189 = vpack.c.b16 %v693, %v689
    %v1190 = vpack.c.b16 %v694, %v690
    %v1191 = vpack.c.b16 %v699, %v695
    %v1192 = vpack.c.b16 %v700, %v696
    %v1193 = vpack.c.b16 %v701, %v697
    %v1194 = vpack.c.b16 %v702, %v698
    %v1195 = vpack.c.b16 %v707, %v703
    %v1196 = vpack.c.b16 %v708, %v704
    %v1197 = vpack.c.b16 %v709, %v705
    %v1198 = vpack.c.b16 %v710, %v706
    %v1199 = vpack.c.b16 %v715, %v711
    %v1200 = vpack.c.b16 %v716, %v712
    %v1201 = vpack.c.b16 %v717, %v713
    %v1202 = vpack.c.b16 %v718, %v714
    %v1203 = vpack.c.b16 %v723, %v719
    %v1204 = vpack.c.b16 %v724, %v720
    %v1205 = vpack.c.b16 %v725, %v721
    %v1206 = vpack.c.b16 %v726, %v722
    %v1207 = vpack.c.b16 %v731, %v727
    %v1208 = vpack.c.b16 %v732, %v728
    %v1209 = vpack.c.b16 %v733, %v729
    %v1210 = vpack.c.b16 %v734, %v730
    %v1211 = vpack.c.b16 %v739, %v735
    %v1212 = vpack.c.b16 %v740, %v736
    %v1213 = vpack.c.b16 %v741, %v737
    %v1214 = vpack.c.b16 %v742, %v738
    %v1215 = vpack.c.b16 %v747, %v743
    %v1216 = vpack.c.b16 %v748, %v744
    %v1217 = vpack.c.b16 %v749, %v745
    %v1218 = vpack.c.b16 %v750, %v746
    %v1219 = vpack.c.b16 %v755, %v751
    %v1220 = vpack.c.b16 %v756, %v752
    %v1221 = vpack.c.b16 %v757, %v753
    %v1222 = vpack.c.b16 %v758, %v754
    %v1223 = vpack.c.b16 %v763, %v759
    %v1224 = vpack.c.b16 %v764, %v760
    %v1225 = vpack.c.b16 %v765, %v761
    %v1226 = vpack.c.b16 %v766, %v762
    %v1227 = vpack.c.b16 %v771, %v767
    %v1228 = vpack.c.b16 %v772, %v768
    %v1229 = vpack.c.b16 %v773, %v769
    %v1230 = vpack.c.b16 %v774, %v770
    %v1231 = vpack.c.b16 %v779, %v775
    %v1232 = vpack.c.b16 %v780, %v776
    %v1233 = vpack.c.b16 %v781, %v777
    %v1234 = vpack.c.b16 %v782, %v778
    %v1235 = vpack.c.b16 %v787, %v783
    %v1236 = vpack.c.b16 %v788, %v784
    %v1237 = vpack.c.b16 %v789, %v785
    %v1238 = vpack.c.b16 %v790, %v786
    %v1239 = vpack.c.b16 %v795, %v791
    %v1240 = vpack.c.b16 %v796, %v792
    %v1241 = vpack.c.b16 %v797, %v793
    %v1242 = vpack.c.b16 %v798, %v794
    %v1243 = vpack.c.b16 %v803, %v799
    %v1244 = vpack.c.b16 %v804, %v800
    %v1245 = vpack.c.b16 %v805, %v801
    %v1246 = vpack.c.b16 %v806, %v802
    %v1247 = vpack.c.b16 %v811, %v807
    %v1248 = vpack.c.b16 %v812, %v808
    %v1249 = vpack.c.b16 %v813, %v809
    %v1250 = vpack.c.b16 %v814, %v810
    %v1251 = vpack.c.b16 %v819, %v815
    %v1252 = vpack.c.b16 %v820, %v816
    %v1253 = vpack.c.b16 %v821, %v817
    %v1254 = vpack.c.b16 %v822, %v818
    %v1255 = vpack.c.b16 %v827, %v823
    %v1256 = vpack.c.b16 %v828, %v824
    %v1257 = vpack.c.b16 %v829, %v825
    %v1258 = vpack.c.b16 %v830, %v826
    %v1259 = vpack.c.b16 %v835, %v831
    %v1260 = vpack.c.b16 %v836, %v832
    %v1261 = vpack.c.b16 %v837, %v833
    %v1262 = vpack.c.b16 %v838, %v834
    %v1263 = vpack.c.b16 %v843, %v839
    %v1264 = vpack.c.b16 %v844, %v840
    %v1265 = vpack.c.b16 %v845, %v841
    %v1266 = vpack.c.b16 %v846, %v842
    %v1267 = vpack.c.b16 %v851, %v847
    %v1268 = vpack.c.b16 %v852, %v848
    %v1269 = vpack.c.b16 %v853, %v849
    %v1270 = vpack.c.b16 %v854, %v850
    %v1271 = vpack.c.b16 %v859, %v855
    %v1272 = vpack.c.b16 %v860, %v856
    %v1273 = vpack.c.b16 %v861, %v857
    %v1274 = vpack.c.b16 %v862, %v858
    %v1275 = vpack.c.b16 %v867, %v863
    %v1276 = vpack.c.b16 %v868, %v864
    %v1277 = vpack.c.b16 %v869, %v865
    %v1278 = vpack.c.b16 %v870, %v866
    %v1279 = vpack.c.b16 %v875, %v871
    %v1280 = vpack.c.b16 %v876, %v872
    %v1281 = vpack.c.b16 %v877, %v873
    %v1282 = vpack.c.b16 %v878, %v874
    %v1283 = vpack.c.b16 %v883, %v879
    %v1284 = vpack.c.b16 %v884, %v880
    %v1285 = vpack.c.b16 %v885, %v881
    %v1286 = vpack.c.b16 %v886, %v882
    %v1287 = vpack.c.b16 %v891, %v887
    %v1288 = vpack.c.b16 %v892, %v888
    %v1289 = vpack.c.b16 %v893, %v889
    %v1290 = vpack.c.b16 %v894, %v890
    %v1291 = vpack.c.b16 %v899, %v895
    %v1292 = vpack.c.b16 %v900, %v896
    %v1293 = vpack.c.b16 %v901, %v897
    %v1294 = vpack.c.b16 %v902, %v898
    %v1295 = vpack.c.b16 %v907, %v903
    %v1296 = vpack.c.b16 %v908, %v904
    %v1297 = vpack.c.b16 %v909, %v905
    %v1298 = vpack.c.b16 %v910, %v906
    %v1299 = vpack.c.b16 %v915, %v911
    %v1300 = vpack.c.b16 %v916, %v912
    %v1301 = vpack.c.b16 %v917, %v913
    %v1302 = vpack.c.b16 %v918, %v914
    %v1303 = vpack.c.b16 %v923, %v919
    %v1304 = vpack.c.b16 %v924, %v920
    %v1305 = vpack.c.b16 %v925, %v921
    %v1306 = vpack.c.b16 %v926, %v922
    %v1307 = vpack.c.b16 %v931, %v927
    %v1308 = vpack.c.b16 %v932, %v928
    %v1309 = vpack.c.b16 %v933, %v929
    %v1310 = vpack.c.b16 %v934, %v930
    %v1311 = vpack.c.b16 %v939, %v935
    %v1312 = vpack.c.b16 %v940, %v936
    %v1313 = vpack.c.b16 %v941, %v937
    %v1314 = vpack.c.b16 %v942, %v938
    %v1315 = vpack.c.b16 %v947, %v943
    %v1316 = vpack.c.b16 %v948, %v944
    %v1317 = vpack.c.b16 %v949, %v945
    %v1318 = vpack.c.b16 %v950, %v946
    %v1319 = vpack.c.b16 %v955, %v951
    %v1320 = vpack.c.b16 %v956, %v952
    %v1321 = vpack.c.b16 %v957, %v953
    %v1322 = vpack.c.b16 %v958, %v954
    %v1323 = vpack.c.b16 %v963, %v959
    %v1324 = vpack.c.b16 %v964, %v960
    %v1325 = vpack.c.b16 %v965, %v961
    %v1326 = vpack.c.b16 %v966, %v962
    %v1327 = vpack.c.b16 %v971, %v967
    %v1328 = vpack.c.b16 %v972, %v968
    %v1329 = vpack.c.b16 %v973, %v969
    %v1330 = vpack.c.b16 %v974, %v970
    %v1331 = vpack.c.b16 %v979, %v975
    %v1332 = vpack.c.b16 %v980, %v976
    %v1333 = vpack.c.b16 %v981, %v977
    %v1334 = vpack.c.b16 %v982, %v978
    %v1335 = vpack.c.b16 %v987, %v983
    %v1336 = vpack.c.b16 %v988, %v984
    %v1337 = vpack.c.b16 %v989, %v985
    %v1338 = vpack.c.b16 %v990, %v986
    %v1339 = vpack.c.b16 %v995, %v991
    %v1340 = vpack.c.b16 %v996, %v992
    %v1341 = vpack.c.b16 %v997, %v993
    %v1342 = vpack.c.b16 %v998, %v994
    %v1343 = vpack.c.b16 %v1003, %v999
    %v1344 = vpack.c.b16 %v1004, %v1000
    %v1345 = vpack.c.b16 %v1005, %v1001
    %v1346 = vpack.c.b16 %v1006, %v1002
    %v1347 = vpack.c.b16 %v1011, %v1007
    %v1348 = vpack.c.b16 %v1012, %v1008
    %v1349 = vpack.c.b16 %v1013, %v1009
    %v1350 = vpack.c.b16 %v1014, %v1010
    %v1351 = vpack.c.b16 %v1019, %v1015
    %v1352 = vpack.c.b16 %v1020, %v1016
    %v1353 = vpack.c.b16 %v1021, %v1017
    %v1354 = vpack.c.b16 %v1022, %v1018
    %v1355 = vpack.c.b16 %v1027, %v1023
    %v1356 = vpack.c.b16 %v1028, %v1024
    %v1357 = vpack.c.b16 %v1029, %v1025
    %v1358 = vpack.c.b16 %v1030, %v1026
    %v1359 = vpack.c.b16 %v1035, %v1031
    %v1360 = vpack.c.b16 %v1036, %v1032
    %v1361 = vpack.c.b16 %v1037, %v1033
    %v1362 = vpack.c.b16 %v1038, %v1034
    %v1363 = vpack.c.b16 %v1043, %v1039
    %v1364 = vpack.c.b16 %v1044, %v1040
    %v1365 = vpack.c.b16 %v1045, %v1041
    %v1366 = vpack.c.b16 %v1046, %v1042
    %v1367 = vpack.c.b16 %v1051, %v1047
    %v1368 = vpack.c.b16 %v1052, %v1048
    %v1369 = vpack.c.b16 %v1053, %v1049
    %v1370 = vpack.c.b16 %v1054, %v1050
    %v1371 = vpack.c.b16 %v1059, %v1055
    %v1372 = vpack.c.b16 %v1060, %v1056
    %v1373 = vpack.c.b16 %v1061, %v1057
    %v1374 = vpack.c.b16 %v1062, %v1058
    %v1375 = vpack.c.b16 %v1067, %v1063
    %v1376 = vpack.c.b16 %v1068, %v1064
    %v1377 = vpack.c.b16 %v1069, %v1065
    %v1378 = vpack.c.b16 %v1070, %v1066
    %v1379 = vpack.c.b16 %v1075, %v1071
    %v1380 = vpack.c.b16 %v1076, %v1072
    %v1381 = vpack.c.b16 %v1077, %v1073
    %v1382 = vpack.c.b16 %v1078, %v1074
    %v1383 = vpack.c.b16 %v1083, %v1079
    %v1384 = vpack.c.b16 %v1084, %v1080
    %v1385 = vpack.c.b16 %v1085, %v1081
    %v1386 = vpack.c.b16 %v1086, %v1082
    %v1387 = vpack.c.b16 %v1091, %v1087
    %v1388 = vpack.c.b16 %v1092, %v1088
    %v1389 = vpack.c.b16 %v1093, %v1089
    %v1390 = vpack.c.b16 %v1094, %v1090
    %v1391 = vpack.c.b16 %v1099, %v1095
    %v1392 = vpack.c.b16 %v1100, %v1096
    %v1393 = vpack.c.b16 %v1101, %v1097
    %v1394 = vpack.c.b16 %v1102, %v1098
    %v1395 = vpack.c.b16 %v1107, %v1103
    %v1396 = vpack.c.b16 %v1108, %v1104
    %v1397 = vpack.c.b16 %v1109, %v1105
    %v1398 = vpack.c.b16 %v1110, %v1106
    %v1399 = vpack.c.b16 %v1115, %v1111
    %v1400 = vpack.c.b16 %v1116, %v1112
    %v1401 = vpack.c.b16 %v1117, %v1113
    %v1402 = vpack.c.b16 %v1118, %v1114
    %v1403 = vpack.c.b16 %v1123, %v1119
    %v1404 = vpack.c.b16 %v1124, %v1120
    %v1405 = vpack.c.b16 %v1125, %v1121
    %v1406 = vpack.c.b16 %v1126, %v1122
    %v1407 = vpack.c.b16 %v1131, %v1127
    %v1408 = vpack.c.b16 %v1132, %v1128
    %v1409 = vpack.c.b16 %v1133, %v1129
    %v1410 = vpack.c.b16 %v1134, %v1130
    %v1411 = vpack.c.b16 %v1139, %v1135
    %v1412 = vpack.c.b16 %v1140, %v1136
    %v1413 = vpack.c.b16 %v1141, %v1137
    %v1414 = vpack.c.b16 %v1142, %v1138
    %v1415 = vpack.c.b16 %v1147, %v1143
    %v1416 = vpack.c.b16 %v1148, %v1144
    %v1417 = vpack.c.b16 %v1149, %v1145
    %v1418 = vpack.c.b16 %v1150, %v1146
    %v1419 = vpack.c.b16 %v1155, %v1151
    %v1420 = vpack.c.b16 %v1156, %v1152
    %v1421 = vpack.c.b16 %v1157, %v1153
    %v1422 = vpack.c.b16 %v1158, %v1154
    %v1423 = vpack.c.b16 %v1163, %v1159
    %v1424 = vpack.c.b16 %v1164, %v1160
    %v1425 = vpack.c.b16 %v1165, %v1161
    %v1426 = vpack.c.b16 %v1166, %v1162
    %v1427 = vpack.c.b16 %v1171, %v1167
    %v1428 = vpack.c.b16 %v1172, %v1168
    %v1429 = vpack.c.b16 %v1173, %v1169
    %v1430 = vpack.c.b16 %v1174, %v1170
    %1687 = vmatpush.bf16.msra.mxu0 %v1203
    %1688 = vmatpush.bf16.msra.mxu0 %v1199
    %1689 = vmatpush.bf16.msra.mxu0 %v1195
    %1690 = vmatpush.bf16.msra.mxu0 %v1191
    %1691 = vmatpush.bf16.msra.mxu0 %v1187
    %1692 = vmatpush.bf16.msra.mxu0 %v1183
    %1693 = vmatpush.bf16.msra.mxu0 %v1179
    %1694 = vmatpush.bf16.msra.mxu0 %v1175
    %1695 = vmatmul.bf16.gmra.mxu0 %v391
    %v1696 = vpop.f32.mrf.mxu0
    %v1697 = vadd.f32 %v371, %v1696
    %v1698 = vpop.f32.mrf.mxu0
    %1699 = vdwg.mxu0
    %1700 = vmatpush.bf16.msra.mxu0 %v1235
    %1701 = vmatpush.bf16.msra.mxu0 %v1231
    %1702 = vmatpush.bf16.msra.mxu0 %v1227
    %1703 = vmatpush.bf16.msra.mxu0 %v1223
    %1704 = vmatpush.bf16.msra.mxu0 %v1219
    %1705 = vmatpush.bf16.msra.mxu0 %v1215
    %1706 = vmatpush.bf16.msra.mxu0 %v1211
    %1707 = vmatpush.bf16.msra.mxu0 %v1207
    %1708 = vmatmul.bf16.gmra.mxu0 %v392
    %v1709 = vpop.f32.mrf.mxu0
    %v1710 = vadd.f32 %v1697, %v1709
    %v1711 = vpop.f32.mrf.mxu0
    %1712 = vdwg.mxu0
    %1713 = vmatpush.bf16.msra.mxu0 %v1267
    %1714 = vmatpush.bf16.msra.mxu0 %v1263
    %1715 = vmatpush.bf16.msra.mxu0 %v1259
    %1716 = vmatpush.bf16.msra.mxu0 %v1255
    %1717 = vmatpush.bf16.msra.mxu0 %v1251
    %1718 = vmatpush.bf16.msra.mxu0 %v1247
    %1719 = vmatpush.bf16.msra.mxu0 %v1243
    %1720 = vmatpush.bf16.msra.mxu0 %v1239
    %1721 = vmatmul.bf16.gmra.mxu0 %v393
    %v1722 = vpop.f32.mrf.mxu0
    %v1723 = vadd.f32 %v1710, %v1722
    %v1724 = vpop.f32.mrf.mxu0
    %1725 = vdwg.mxu0
    %1726 = vmatpush.bf16.msra.mxu0 %v1299
    %1727 = vmatpush.bf16.msra.mxu0 %v1295
    %1728 = vmatpush.bf16.msra.mxu0 %v1291
    %1729 = vmatpush.bf16.msra.mxu0 %v1287
    %1730 = vmatpush.bf16.msra.mxu0 %v1283
    %1731 = vmatpush.bf16.msra.mxu0 %v1279
    %1732 = vmatpush.bf16.msra.mxu0 %v1275
    %1733 = vmatpush.bf16.msra.mxu0 %v1271
    %1734 = vmatmul.bf16.gmra.mxu0 %v394
    %v1735 = vpop.f32.mrf.mxu0
    %v1736 = vadd.f32 %v1723, %v1735
    %v1737 = vpop.f32.mrf.mxu0
    %1738 = vdwg.mxu0
    %1739 = vmatpush.bf16.msra.mxu0 %v1331
    %1740 = vmatpush.bf16.msra.mxu0 %v1327
    %1741 = vmatpush.bf16.msra.mxu0 %v1323
    %1742 = vmatpush.bf16.msra.mxu0 %v1319
    %1743 = vmatpush.bf16.msra.mxu0 %v1315
    %1744 = vmatpush.bf16.msra.mxu0 %v1311
    %1745 = vmatpush.bf16.msra.mxu0 %v1307
    %1746 = vmatpush.bf16.msra.mxu0 %v1303
    %1747 = vmatmul.bf16.gmra.mxu0 %v395
    %v1748 = vpop.f32.mrf.mxu0
    %v1749 = vadd.f32 %v1736, %v1748
    %v1750 = vpop.f32.mrf.mxu0
    %1751 = vdwg.mxu0
    %1752 = vmatpush.bf16.msra.mxu0 %v1363
    %1753 = vmatpush.bf16.msra.mxu0 %v1359
    %1754 = vmatpush.bf16.msra.mxu0 %v1355
    %1755 = vmatpush.bf16.msra.mxu0 %v1351
    %1756 = vmatpush.bf16.msra.mxu0 %v1347
    %1757 = vmatpush.bf16.msra.mxu0 %v1343
    %1758 = vmatpush.bf16.msra.mxu0 %v1339
    %1759 = vmatpush.bf16.msra.mxu0 %v1335
    %1760 = vmatmul.bf16.gmra.mxu0 %v396
    %v1761 = vpop.f32.mrf.mxu0
    %v1762 = vadd.f32 %v1749, %v1761
    %v1763 = vpop.f32.mrf.mxu0
    %1764 = vdwg.mxu0
    %1765 = vmatpush.bf16.msra.mxu0 %v1395
    %1766 = vmatpush.bf16.msra.mxu0 %v1391
    %1767 = vmatpush.bf16.msra.mxu0 %v1387
    %1768 = vmatpush.bf16.msra.mxu0 %v1383
    %1769 = vmatpush.bf16.msra.mxu0 %v1379
    %1770 = vmatpush.bf16.msra.mxu0 %v1375
    %1771 = vmatpush.bf16.msra.mxu0 %v1371
    %1772 = vmatpush.bf16.msra.mxu0 %v1367
    %1773 = vmatmul.bf16.gmra.mxu0 %v397
    %v1774 = vpop.f32.mrf.mxu0
    %v1775 = vadd.f32 %v1762, %v1774
    %v1776 = vpop.f32.mrf.mxu0
    %1777 = vdwg.mxu0
    %1778 = vmatpush.bf16.msra.mxu0 %v1427
    %1779 = vmatpush.bf16.msra.mxu0 %v1423
    %1780 = vmatpush.bf16.msra.mxu0 %v1419
    %1781 = vmatpush.bf16.msra.mxu0 %v1415
    %1782 = vmatpush.bf16.msra.mxu0 %v1411
    %1783 = vmatpush.bf16.msra.mxu0 %v1407
    %1784 = vmatpush.bf16.msra.mxu0 %v1403
    %1785 = vmatpush.bf16.msra.mxu0 %v1399
    %1786 = vmatmul.bf16.gmra.mxu0 %v398
    %v1787 = vpop.f32.mrf.mxu0
    %v1788 = vadd.f32 %v1775, %v1787
    %v1789 = vpop.f32.mrf.mxu0
    %1790 = vdwg.mxu0
    %1791 = vmatpush.bf16.msra.mxu0 %v1204
    %1792 = vmatpush.bf16.msra.mxu0 %v1200
    %1793 = vmatpush.bf16.msra.mxu0 %v1196
    %1794 = vmatpush.bf16.msra.mxu0 %v1192
    %1795 = vmatpush.bf16.msra.mxu0 %v1188
    %1796 = vmatpush.bf16.msra.mxu0 %v1184
    %1797 = vmatpush.bf16.msra.mxu0 %v1180
    %1798 = vmatpush.bf16.msra.mxu0 %v1176
    %1799 = vmatmul.bf16.gmra.mxu0 %v391
    %v1800 = vpop.f32.mrf.mxu0
    %v1801 = vadd.f32 %v372, %v1800
    %v1802 = vpop.f32.mrf.mxu0
    %1803 = vdwg.mxu0
    %1804 = vmatpush.bf16.msra.mxu0 %v1236
    %1805 = vmatpush.bf16.msra.mxu0 %v1232
    %1806 = vmatpush.bf16.msra.mxu0 %v1228
    %1807 = vmatpush.bf16.msra.mxu0 %v1224
    %1808 = vmatpush.bf16.msra.mxu0 %v1220
    %1809 = vmatpush.bf16.msra.mxu0 %v1216
    %1810 = vmatpush.bf16.msra.mxu0 %v1212
    %1811 = vmatpush.bf16.msra.mxu0 %v1208
    %1812 = vmatmul.bf16.gmra.mxu0 %v392
    %v1813 = vpop.f32.mrf.mxu0
    %v1814 = vadd.f32 %v1801, %v1813
    %v1815 = vpop.f32.mrf.mxu0
    %1816 = vdwg.mxu0
    %1817 = vmatpush.bf16.msra.mxu0 %v1268
    %1818 = vmatpush.bf16.msra.mxu0 %v1264
    %1819 = vmatpush.bf16.msra.mxu0 %v1260
    %1820 = vmatpush.bf16.msra.mxu0 %v1256
    %1821 = vmatpush.bf16.msra.mxu0 %v1252
    %1822 = vmatpush.bf16.msra.mxu0 %v1248
    %1823 = vmatpush.bf16.msra.mxu0 %v1244
    %1824 = vmatpush.bf16.msra.mxu0 %v1240
    %1825 = vmatmul.bf16.gmra.mxu0 %v393
    %v1826 = vpop.f32.mrf.mxu0
    %v1827 = vadd.f32 %v1814, %v1826
    %v1828 = vpop.f32.mrf.mxu0
    %1829 = vdwg.mxu0
    %1830 = vmatpush.bf16.msra.mxu0 %v1300
    %1831 = vmatpush.bf16.msra.mxu0 %v1296
    %1832 = vmatpush.bf16.msra.mxu0 %v1292
    %1833 = vmatpush.bf16.msra.mxu0 %v1288
    %1834 = vmatpush.bf16.msra.mxu0 %v1284
    %1835 = vmatpush.bf16.msra.mxu0 %v1280
    %1836 = vmatpush.bf16.msra.mxu0 %v1276
    %1837 = vmatpush.bf16.msra.mxu0 %v1272
    %1838 = vmatmul.bf16.gmra.mxu0 %v394
    %v1839 = vpop.f32.mrf.mxu0
    %v1840 = vadd.f32 %v1827, %v1839
    %v1841 = vpop.f32.mrf.mxu0
    %1842 = vdwg.mxu0
    %1843 = vmatpush.bf16.msra.mxu0 %v1332
    %1844 = vmatpush.bf16.msra.mxu0 %v1328
    %1845 = vmatpush.bf16.msra.mxu0 %v1324
    %1846 = vmatpush.bf16.msra.mxu0 %v1320
    %1847 = vmatpush.bf16.msra.mxu0 %v1316
    %1848 = vmatpush.bf16.msra.mxu0 %v1312
    %1849 = vmatpush.bf16.msra.mxu0 %v1308
    %1850 = vmatpush.bf16.msra.mxu0 %v1304
    %1851 = vmatmul.bf16.gmra.mxu0 %v395
    %v1852 = vpop.f32.mrf.mxu0
    %v1853 = vadd.f32 %v1840, %v1852
    %v1854 = vpop.f32.mrf.mxu0
    %1855 = vdwg.mxu0
    %1856 = vmatpush.bf16.msra.mxu0 %v1364
    %1857 = vmatpush.bf16.msra.mxu0 %v1360
    %1858 = vmatpush.bf16.msra.mxu0 %v1356
    %1859 = vmatpush.bf16.msra.mxu0 %v1352
    %1860 = vmatpush.bf16.msra.mxu0 %v1348
    %1861 = vmatpush.bf16.msra.mxu0 %v1344
    %1862 = vmatpush.bf16.msra.mxu0 %v1340
    %1863 = vmatpush.bf16.msra.mxu0 %v1336
    %1864 = vmatmul.bf16.gmra.mxu0 %v396
    %v1865 = vpop.f32.mrf.mxu0
    %v1866 = vadd.f32 %v1853, %v1865
    %v1867 = vpop.f32.mrf.mxu0
    %1868 = vdwg.mxu0
    %1869 = vmatpush.bf16.msra.mxu0 %v1396
    %1870 = vmatpush.bf16.msra.mxu0 %v1392
    %1871 = vmatpush.bf16.msra.mxu0 %v1388
    %1872 = vmatpush.bf16.msra.mxu0 %v1384
    %1873 = vmatpush.bf16.msra.mxu0 %v1380
    %1874 = vmatpush.bf16.msra.mxu0 %v1376
    %1875 = vmatpush.bf16.msra.mxu0 %v1372
    %1876 = vmatpush.bf16.msra.mxu0 %v1368
    %1877 = vmatmul.bf16.gmra.mxu0 %v397
    %v1878 = vpop.f32.mrf.mxu0
    %v1879 = vadd.f32 %v1866, %v1878
    %v1880 = vpop.f32.mrf.mxu0
    %1881 = vdwg.mxu0
    %1882 = vmatpush.bf16.msra.mxu0 %v1428
    %1883 = vmatpush.bf16.msra.mxu0 %v1424
    %1884 = vmatpush.bf16.msra.mxu0 %v1420
    %1885 = vmatpush.bf16.msra.mxu0 %v1416
    %1886 = vmatpush.bf16.msra.mxu0 %v1412
    %1887 = vmatpush.bf16.msra.mxu0 %v1408
    %1888 = vmatpush.bf16.msra.mxu0 %v1404
    %1889 = vmatpush.bf16.msra.mxu0 %v1400
    %1890 = vmatmul.bf16.gmra.mxu0 %v398
    %v1891 = vpop.f32.mrf.mxu0
    %v1892 = vadd.f32 %v1879, %v1891
    %v1893 = vpop.f32.mrf.mxu0
    %1894 = vdwg.mxu0
    %1895 = vmatpush.bf16.msra.mxu0 %v1205
    %1896 = vmatpush.bf16.msra.mxu0 %v1201
    %1897 = vmatpush.bf16.msra.mxu0 %v1197
    %1898 = vmatpush.bf16.msra.mxu0 %v1193
    %1899 = vmatpush.bf16.msra.mxu0 %v1189
    %1900 = vmatpush.bf16.msra.mxu0 %v1185
    %1901 = vmatpush.bf16.msra.mxu0 %v1181
    %1902 = vmatpush.bf16.msra.mxu0 %v1177
    %1903 = vmatmul.bf16.gmra.mxu0 %v391
    %v1904 = vpop.f32.mrf.mxu0
    %v1905 = vadd.f32 %v373, %v1904
    %v1906 = vpop.f32.mrf.mxu0
    %1907 = vdwg.mxu0
    %1908 = vmatpush.bf16.msra.mxu0 %v1237
    %1909 = vmatpush.bf16.msra.mxu0 %v1233
    %1910 = vmatpush.bf16.msra.mxu0 %v1229
    %1911 = vmatpush.bf16.msra.mxu0 %v1225
    %1912 = vmatpush.bf16.msra.mxu0 %v1221
    %1913 = vmatpush.bf16.msra.mxu0 %v1217
    %1914 = vmatpush.bf16.msra.mxu0 %v1213
    %1915 = vmatpush.bf16.msra.mxu0 %v1209
    %1916 = vmatmul.bf16.gmra.mxu0 %v392
    %v1917 = vpop.f32.mrf.mxu0
    %v1918 = vadd.f32 %v1905, %v1917
    %v1919 = vpop.f32.mrf.mxu0
    %1920 = vdwg.mxu0
    %1921 = vmatpush.bf16.msra.mxu0 %v1269
    %1922 = vmatpush.bf16.msra.mxu0 %v1265
    %1923 = vmatpush.bf16.msra.mxu0 %v1261
    %1924 = vmatpush.bf16.msra.mxu0 %v1257
    %1925 = vmatpush.bf16.msra.mxu0 %v1253
    %1926 = vmatpush.bf16.msra.mxu0 %v1249
    %1927 = vmatpush.bf16.msra.mxu0 %v1245
    %1928 = vmatpush.bf16.msra.mxu0 %v1241
    %1929 = vmatmul.bf16.gmra.mxu0 %v393
    %v1930 = vpop.f32.mrf.mxu0
    %v1931 = vadd.f32 %v1918, %v1930
    %v1932 = vpop.f32.mrf.mxu0
    %1933 = vdwg.mxu0
    %1934 = vmatpush.bf16.msra.mxu0 %v1301
    %1935 = vmatpush.bf16.msra.mxu0 %v1297
    %1936 = vmatpush.bf16.msra.mxu0 %v1293
    %1937 = vmatpush.bf16.msra.mxu0 %v1289
    %1938 = vmatpush.bf16.msra.mxu0 %v1285
    %1939 = vmatpush.bf16.msra.mxu0 %v1281
    %1940 = vmatpush.bf16.msra.mxu0 %v1277
    %1941 = vmatpush.bf16.msra.mxu0 %v1273
    %1942 = vmatmul.bf16.gmra.mxu0 %v394
    %v1943 = vpop.f32.mrf.mxu0
    %v1944 = vadd.f32 %v1931, %v1943
    %v1945 = vpop.f32.mrf.mxu0
    %1946 = vdwg.mxu0
    %1947 = vmatpush.bf16.msra.mxu0 %v1333
    %1948 = vmatpush.bf16.msra.mxu0 %v1329
    %1949 = vmatpush.bf16.msra.mxu0 %v1325
    %1950 = vmatpush.bf16.msra.mxu0 %v1321
    %1951 = vmatpush.bf16.msra.mxu0 %v1317
    %1952 = vmatpush.bf16.msra.mxu0 %v1313
    %1953 = vmatpush.bf16.msra.mxu0 %v1309
    %1954 = vmatpush.bf16.msra.mxu0 %v1305
    %1955 = vmatmul.bf16.gmra.mxu0 %v395
    %v1956 = vpop.f32.mrf.mxu0
    %v1957 = vadd.f32 %v1944, %v1956
    %v1958 = vpop.f32.mrf.mxu0
    %1959 = vdwg.mxu0
    %1960 = vmatpush.bf16.msra.mxu0 %v1365
    %1961 = vmatpush.bf16.msra.mxu0 %v1361
    %1962 = vmatpush.bf16.msra.mxu0 %v1357
    %1963 = vmatpush.bf16.msra.mxu0 %v1353
    %1964 = vmatpush.bf16.msra.mxu0 %v1349
    %1965 = vmatpush.bf16.msra.mxu0 %v1345
    %1966 = vmatpush.bf16.msra.mxu0 %v1341
    %1967 = vmatpush.bf16.msra.mxu0 %v1337
    %1968 = vmatmul.bf16.gmra.mxu0 %v396
    %v1969 = vpop.f32.mrf.mxu0
    %v1970 = vadd.f32 %v1957, %v1969
    %v1971 = vpop.f32.mrf.mxu0
    %1972 = vdwg.mxu0
    %1973 = vmatpush.bf16.msra.mxu0 %v1397
    %1974 = vmatpush.bf16.msra.mxu0 %v1393
    %1975 = vmatpush.bf16.msra.mxu0 %v1389
    %1976 = vmatpush.bf16.msra.mxu0 %v1385
    %1977 = vmatpush.bf16.msra.mxu0 %v1381
    %1978 = vmatpush.bf16.msra.mxu0 %v1377
    %1979 = vmatpush.bf16.msra.mxu0 %v1373
    %1980 = vmatpush.bf16.msra.mxu0 %v1369
    %1981 = vmatmul.bf16.gmra.mxu0 %v397
    %v1982 = vpop.f32.mrf.mxu0
    %v1983 = vadd.f32 %v1970, %v1982
    %v1984 = vpop.f32.mrf.mxu0
    %1985 = vdwg.mxu0
    %1986 = vmatpush.bf16.msra.mxu0 %v1429
    %1987 = vmatpush.bf16.msra.mxu0 %v1425
    %1988 = vmatpush.bf16.msra.mxu0 %v1421
    %1989 = vmatpush.bf16.msra.mxu0 %v1417
    %1990 = vmatpush.bf16.msra.mxu0 %v1413
    %1991 = vmatpush.bf16.msra.mxu0 %v1409
    %1992 = vmatpush.bf16.msra.mxu0 %v1405
    %1993 = vmatpush.bf16.msra.mxu0 %v1401
    %1994 = vmatmul.bf16.gmra.mxu0 %v398
    %v1995 = vpop.f32.mrf.mxu0
    %v1996 = vadd.f32 %v1983, %v1995
    %v1997 = vpop.f32.mrf.mxu0
    %1998 = vdwg.mxu0
    %1999 = vmatpush.bf16.msra.mxu0 %v1206
    %2000 = vmatpush.bf16.msra.mxu0 %v1202
    %2001 = vmatpush.bf16.msra.mxu0 %v1198
    %2002 = vmatpush.bf16.msra.mxu0 %v1194
    %2003 = vmatpush.bf16.msra.mxu0 %v1190
    %2004 = vmatpush.bf16.msra.mxu0 %v1186
    %2005 = vmatpush.bf16.msra.mxu0 %v1182
    %2006 = vmatpush.bf16.msra.mxu0 %v1178
    %2007 = vmatmul.bf16.gmra.mxu0 %v391
    %v2008 = vpop.f32.mrf.mxu0
    %v2009 = vadd.f32 %v374, %v2008
    %v2010 = vpop.f32.mrf.mxu0
    %2011 = vdwg.mxu0
    %2012 = vmatpush.bf16.msra.mxu0 %v1238
    %2013 = vmatpush.bf16.msra.mxu0 %v1234
    %2014 = vmatpush.bf16.msra.mxu0 %v1230
    %2015 = vmatpush.bf16.msra.mxu0 %v1226
    %2016 = vmatpush.bf16.msra.mxu0 %v1222
    %2017 = vmatpush.bf16.msra.mxu0 %v1218
    %2018 = vmatpush.bf16.msra.mxu0 %v1214
    %2019 = vmatpush.bf16.msra.mxu0 %v1210
    %2020 = vmatmul.bf16.gmra.mxu0 %v392
    %v2021 = vpop.f32.mrf.mxu0
    %v2022 = vadd.f32 %v2009, %v2021
    %v2023 = vpop.f32.mrf.mxu0
    %2024 = vdwg.mxu0
    %2025 = vmatpush.bf16.msra.mxu0 %v1270
    %2026 = vmatpush.bf16.msra.mxu0 %v1266
    %2027 = vmatpush.bf16.msra.mxu0 %v1262
    %2028 = vmatpush.bf16.msra.mxu0 %v1258
    %2029 = vmatpush.bf16.msra.mxu0 %v1254
    %2030 = vmatpush.bf16.msra.mxu0 %v1250
    %2031 = vmatpush.bf16.msra.mxu0 %v1246
    %2032 = vmatpush.bf16.msra.mxu0 %v1242
    %2033 = vmatmul.bf16.gmra.mxu0 %v393
    %v2034 = vpop.f32.mrf.mxu0
    %v2035 = vadd.f32 %v2022, %v2034
    %v2036 = vpop.f32.mrf.mxu0
    %2037 = vdwg.mxu0
    %2038 = vmatpush.bf16.msra.mxu0 %v1302
    %2039 = vmatpush.bf16.msra.mxu0 %v1298
    %2040 = vmatpush.bf16.msra.mxu0 %v1294
    %2041 = vmatpush.bf16.msra.mxu0 %v1290
    %2042 = vmatpush.bf16.msra.mxu0 %v1286
    %2043 = vmatpush.bf16.msra.mxu0 %v1282
    %2044 = vmatpush.bf16.msra.mxu0 %v1278
    %2045 = vmatpush.bf16.msra.mxu0 %v1274
    %2046 = vmatmul.bf16.gmra.mxu0 %v394
    %v2047 = vpop.f32.mrf.mxu0
    %v2048 = vadd.f32 %v2035, %v2047
    %v2049 = vpop.f32.mrf.mxu0
    %2050 = vdwg.mxu0
    %2051 = vmatpush.bf16.msra.mxu0 %v1334
    %2052 = vmatpush.bf16.msra.mxu0 %v1330
    %2053 = vmatpush.bf16.msra.mxu0 %v1326
    %2054 = vmatpush.bf16.msra.mxu0 %v1322
    %2055 = vmatpush.bf16.msra.mxu0 %v1318
    %2056 = vmatpush.bf16.msra.mxu0 %v1314
    %2057 = vmatpush.bf16.msra.mxu0 %v1310
    %2058 = vmatpush.bf16.msra.mxu0 %v1306
    %2059 = vmatmul.bf16.gmra.mxu0 %v395
    %v2060 = vpop.f32.mrf.mxu0
    %v2061 = vadd.f32 %v2048, %v2060
    %v2062 = vpop.f32.mrf.mxu0
    %2063 = vdwg.mxu0
    %2064 = vmatpush.bf16.msra.mxu0 %v1366
    %2065 = vmatpush.bf16.msra.mxu0 %v1362
    %2066 = vmatpush.bf16.msra.mxu0 %v1358
    %2067 = vmatpush.bf16.msra.mxu0 %v1354
    %2068 = vmatpush.bf16.msra.mxu0 %v1350
    %2069 = vmatpush.bf16.msra.mxu0 %v1346
    %2070 = vmatpush.bf16.msra.mxu0 %v1342
    %2071 = vmatpush.bf16.msra.mxu0 %v1338
    %2072 = vmatmul.bf16.gmra.mxu0 %v396
    %v2073 = vpop.f32.mrf.mxu0
    %v2074 = vadd.f32 %v2061, %v2073
    %v2075 = vpop.f32.mrf.mxu0
    %2076 = vdwg.mxu0
    %2077 = vmatpush.bf16.msra.mxu0 %v1398
    %2078 = vmatpush.bf16.msra.mxu0 %v1394
    %2079 = vmatpush.bf16.msra.mxu0 %v1390
    %2080 = vmatpush.bf16.msra.mxu0 %v1386
    %2081 = vmatpush.bf16.msra.mxu0 %v1382
    %2082 = vmatpush.bf16.msra.mxu0 %v1378
    %2083 = vmatpush.bf16.msra.mxu0 %v1374
    %2084 = vmatpush.bf16.msra.mxu0 %v1370
    %2085 = vmatmul.bf16.gmra.mxu0 %v397
    %v2086 = vpop.f32.mrf.mxu0
    %v2087 = vadd.f32 %v2074, %v2086
    %v2088 = vpop.f32.mrf.mxu0
    %2089 = vdwg.mxu0
    %2090 = vmatpush.bf16.msra.mxu0 %v1430
    %2091 = vmatpush.bf16.msra.mxu0 %v1426
    %2092 = vmatpush.bf16.msra.mxu0 %v1422
    %2093 = vmatpush.bf16.msra.mxu0 %v1418
    %2094 = vmatpush.bf16.msra.mxu0 %v1414
    %2095 = vmatpush.bf16.msra.mxu0 %v1410
    %2096 = vmatpush.bf16.msra.mxu0 %v1406
    %2097 = vmatpush.bf16.msra.mxu0 %v1402
    %2098 = vmatmul.bf16.gmra.mxu0 %v398
    %v2099 = vpop.f32.mrf.mxu0
    %v2100 = vadd.f32 %v2087, %v2099
    %v2101 = vpop.f32.mrf.mxu0
    %2102 = vdwg.mxu0
    %v2103 = vmax.f32 %v1788, 0.0
    %v2104 = vmax.f32 %v1892, 0.0
    %v2105 = vmax.f32 %v1996, 0.0
    %v2106 = vmax.f32 %v2100, 0.0
    %v2107 = vpack.c.bf16 %v2103, %v2103
    %v2108 = vpack.c.bf16 %v2104, %v2104
    %v2109 = vpack.c.bf16 %v2105, %v2105
    %v2110 = vpack.c.bf16 %v2106, %v2106
    %v2111 = vld [vmem:[#allocation9] sm:$0xf]
    %v2112 = vld [vmem:[#allocation9 + $0x4] sm:$0xf]
    %v2113 = vld [vmem:[#allocation9 + $0x8] sm:$0xf]
    %v2114 = vld [vmem:[#allocation9 + $0xc] sm:$0xf]
    %v2115 = vld [vmem:[#allocation9 + $0x10] sm:$0xf]
    %v2116 = vld [vmem:[#allocation9 + $0x14] sm:$0xf]
    %v2117 = vld [vmem:[#allocation9 + $0x18] sm:$0xf]
    %v2118 = vld [vmem:[#allocation9 + $0x1c] sm:$0xf]
    %v2119 = vld [vmem:[#allocation9 + $0x20] sm:$0xf]
    %v2120 = vld [vmem:[#allocation9 + $0x24] sm:$0xf]
    %v2121 = vld [vmem:[#allocation9 + $0x28] sm:$0xf]
    %v2122 = vld [vmem:[#allocation9 + $0x2c] sm:$0xf]
    %v2123 = vld [vmem:[#allocation9 + $0x30] sm:$0xf]
    %v2124 = vld [vmem:[#allocation9 + $0x34] sm:$0xf]
    %v2125 = vld [vmem:[#allocation9 + $0x38] sm:$0xf]
    %v2126 = vld [vmem:[#allocation9 + $0x3c] sm:$0xf]
    %v2127 = vld [vmem:[#allocation9 + $0x40] sm:$0xf]
    %v2128 = vld [vmem:[#allocation9 + $0x44] sm:$0xf]
    %v2129 = vld [vmem:[#allocation9 + $0x48] sm:$0xf]
    %v2130 = vld [vmem:[#allocation9 + $0x4c] sm:$0xf]
    %v2131 = vld [vmem:[#allocation9 + $0x50] sm:$0xf]
    %v2132 = vld [vmem:[#allocation9 + $0x54] sm:$0xf]
    %v2133 = vld [vmem:[#allocation9 + $0x58] sm:$0xf]
    %v2134 = vld [vmem:[#allocation9 + $0x5c] sm:$0xf]
    %v2135 = vld [vmem:[#allocation9 + $0x60] sm:$0xf]
    %v2136 = vld [vmem:[#allocation9 + $0x64] sm:$0xf]
    %v2137 = vld [vmem:[#allocation9 + $0x68] sm:$0xf]
    %v2138 = vld [vmem:[#allocation9 + $0x6c] sm:$0xf]
    %v2139 = vld [vmem:[#allocation9 + $0x70] sm:$0xf]
    %v2140 = vld [vmem:[#allocation9 + $0x74] sm:$0xf]
    %v2141 = vld [vmem:[#allocation9 + $0x78] sm:$0xf]
    %v2142 = vld [vmem:[#allocation9 + $0x7c] sm:$0xf]
    %v2143 = vld [vmem:[#allocation9 + $0x80] sm:$0xf]
    %v2144 = vld [vmem:[#allocation9 + $0x84] sm:$0xf]
    %v2145 = vld [vmem:[#allocation9 + $0x88] sm:$0xf]
    %v2146 = vld [vmem:[#allocation9 + $0x8c] sm:$0xf]
    %v2147 = vld [vmem:[#allocation9 + $0x90] sm:$0xf]
    %v2148 = vld [vmem:[#allocation9 + $0x94] sm:$0xf]
    %v2149 = vld [vmem:[#allocation9 + $0x98] sm:$0xf]
    %v2150 = vld [vmem:[#allocation9 + $0x9c] sm:$0xf]
    %v2151 = vld [vmem:[#allocation9 + $0xa0] sm:$0xf]
    %v2152 = vld [vmem:[#allocation9 + $0xa4] sm:$0xf]
    %v2153 = vld [vmem:[#allocation9 + $0xa8] sm:$0xf]
    %v2154 = vld [vmem:[#allocation9 + $0xac] sm:$0xf]
    %v2155 = vld [vmem:[#allocation9 + $0xb0] sm:$0xf]
    %v2156 = vld [vmem:[#allocation9 + $0xb4] sm:$0xf]
    %v2157 = vld [vmem:[#allocation9 + $0xb8] sm:$0xf]
    %v2158 = vld [vmem:[#allocation9 + $0xbc] sm:$0xf]
    %v2159 = vld [vmem:[#allocation9 + $0xc0] sm:$0xf]
    %v2160 = vld [vmem:[#allocation9 + $0xc4] sm:$0xf]
    %v2161 = vld [vmem:[#allocation9 + $0xc8] sm:$0xf]
    %v2162 = vld [vmem:[#allocation9 + $0xcc] sm:$0xf]
    %v2163 = vld [vmem:[#allocation9 + $0xd0] sm:$0xf]
    %v2164 = vld [vmem:[#allocation9 + $0xd4] sm:$0xf]
    %v2165 = vld [vmem:[#allocation9 + $0xd8] sm:$0xf]
    %v2166 = vld [vmem:[#allocation9 + $0xdc] sm:$0xf]
    %v2167 = vld [vmem:[#allocation9 + $0xe0] sm:$0xf]
    %v2168 = vld [vmem:[#allocation9 + $0xe4] sm:$0xf]
    %v2169 = vld [vmem:[#allocation9 + $0xe8] sm:$0xf]
    %v2170 = vld [vmem:[#allocation9 + $0xec] sm:$0xf]
    %v2171 = vld [vmem:[#allocation9 + $0xf0] sm:$0xf]
    %v2172 = vld [vmem:[#allocation9 + $0xf4] sm:$0xf]
    %v2173 = vld [vmem:[#allocation9 + $0xf8] sm:$0xf]
    %v2174 = vld [vmem:[#allocation9 + $0xfc] sm:$0xf]
    %v2175 = vld [vmem:[%s4] sm:$0x1]
    %v2177 = vperm.slane %v2175, 0
    %v2243 = vunpack.c.l.b16 %v2111
    %v2244 = vunpack.c.l.b16 %v2112
    %v2245 = vunpack.c.l.b16 %v2113
    %v2246 = vunpack.c.l.b16 %v2114
    %v2247 = vunpack.c.l.b16 %v2115
    %v2248 = vunpack.c.l.b16 %v2116
    %v2249 = vunpack.c.l.b16 %v2117
    %v2250 = vunpack.c.l.b16 %v2118
    %v2251 = vunpack.c.l.b16 %v2119
    %v2252 = vunpack.c.l.b16 %v2120
    %v2253 = vunpack.c.l.b16 %v2121
    %v2254 = vunpack.c.l.b16 %v2122
    %v2255 = vunpack.c.l.b16 %v2123
    %v2256 = vunpack.c.l.b16 %v2124
    %v2257 = vunpack.c.l.b16 %v2125
    %v2258 = vunpack.c.l.b16 %v2126
    %v2259 = vunpack.c.l.b16 %v2127
    %v2260 = vunpack.c.l.b16 %v2128
    %v2261 = vunpack.c.l.b16 %v2129
    %v2262 = vunpack.c.l.b16 %v2130
    %v2263 = vunpack.c.l.b16 %v2131
    %v2264 = vunpack.c.l.b16 %v2132
    %v2265 = vunpack.c.l.b16 %v2133
    %v2266 = vunpack.c.l.b16 %v2134
    %v2267 = vunpack.c.l.b16 %v2135
    %v2268 = vunpack.c.l.b16 %v2136
    %v2269 = vunpack.c.l.b16 %v2137
    %v2270 = vunpack.c.l.b16 %v2138
    %v2271 = vunpack.c.l.b16 %v2139
    %v2272 = vunpack.c.l.b16 %v2140
    %v2273 = vunpack.c.l.b16 %v2141
    %v2274 = vunpack.c.l.b16 %v2142
    %v2275 = vunpack.c.l.b16 %v2143
    %v2276 = vunpack.c.l.b16 %v2144
    %v2277 = vunpack.c.l.b16 %v2145
    %v2278 = vunpack.c.l.b16 %v2146
    %v2279 = vunpack.c.l.b16 %v2147
    %v2280 = vunpack.c.l.b16 %v2148
    %v2281 = vunpack.c.l.b16 %v2149
    %v2282 = vunpack.c.l.b16 %v2150
    %v2283 = vunpack.c.l.b16 %v2151
    %v2284 = vunpack.c.l.b16 %v2152
    %v2285 = vunpack.c.l.b16 %v2153
    %v2286 = vunpack.c.l.b16 %v2154
    %v2287 = vunpack.c.l.b16 %v2155
    %v2288 = vunpack.c.l.b16 %v2156
    %v2289 = vunpack.c.l.b16 %v2157
    %v2290 = vunpack.c.l.b16 %v2158
    %v2291 = vunpack.c.l.b16 %v2159
    %v2292 = vunpack.c.l.b16 %v2160
    %v2293 = vunpack.c.l.b16 %v2161
    %v2294 = vunpack.c.l.b16 %v2162
    %v2295 = vunpack.c.l.b16 %v2163
    %v2296 = vunpack.c.l.b16 %v2164
    %v2297 = vunpack.c.l.b16 %v2165
    %v2298 = vunpack.c.l.b16 %v2166
    %v2299 = vunpack.c.l.b16 %v2167
    %v2300 = vunpack.c.l.b16 %v2168
    %v2301 = vunpack.c.l.b16 %v2169
    %v2302 = vunpack.c.l.b16 %v2170
    %v2303 = vunpack.c.l.b16 %v2171
    %v2304 = vunpack.c.l.b16 %v2172
    %v2305 = vunpack.c.l.b16 %v2173
    %v2306 = vunpack.c.l.b16 %v2174
    %v2307 = vpack.c.b16 %v2244, %v2243
    %v2308 = vpack.c.b16 %v2246, %v2245
    %v2309 = vpack.c.b16 %v2248, %v2247
    %v2310 = vpack.c.b16 %v2250, %v2249
    %v2311 = vpack.c.b16 %v2252, %v2251
    %v2312 = vpack.c.b16 %v2254, %v2253
    %v2313 = vpack.c.b16 %v2256, %v2255
    %v2314 = vpack.c.b16 %v2258, %v2257
    %v2315 = vpack.c.b16 %v2260, %v2259
    %v2316 = vpack.c.b16 %v2262, %v2261
    %v2317 = vpack.c.b16 %v2264, %v2263
    %v2318 = vpack.c.b16 %v2266, %v2265
    %v2319 = vpack.c.b16 %v2268, %v2267
    %v2320 = vpack.c.b16 %v2270, %v2269
    %v2321 = vpack.c.b16 %v2272, %v2271
    %v2322 = vpack.c.b16 %v2274, %v2273
    %v2323 = vpack.c.b16 %v2276, %v2275
    %v2324 = vpack.c.b16 %v2278, %v2277
    %v2325 = vpack.c.b16 %v2280, %v2279
    %v2326 = vpack.c.b16 %v2282, %v2281
    %v2327 = vpack.c.b16 %v2284, %v2283
    %v2328 = vpack.c.b16 %v2286, %v2285
    %v2329 = vpack.c.b16 %v2288, %v2287
    %v2330 = vpack.c.b16 %v2290, %v2289
    %v2331 = vpack.c.b16 %v2292, %v2291
    %v2332 = vpack.c.b16 %v2294, %v2293
    %v2333 = vpack.c.b16 %v2296, %v2295
    %v2334 = vpack.c.b16 %v2298, %v2297
    %v2335 = vpack.c.b16 %v2300, %v2299
    %v2336 = vpack.c.b16 %v2302, %v2301
    %v2337 = vpack.c.b16 %v2304, %v2303
    %v2338 = vpack.c.b16 %v2306, %v2305
    %2371 = vmatpush.bf16.msra.mxu0 %v2314
    %2372 = vmatpush.bf16.msra.mxu0 %v2313
    %2373 = vmatpush.bf16.msra.mxu0 %v2312
    %2374 = vmatpush.bf16.msra.mxu0 %v2311
    %2375 = vmatpush.bf16.msra.mxu0 %v2310
    %2376 = vmatpush.bf16.msra.mxu0 %v2309
    %2377 = vmatpush.bf16.msra.mxu0 %v2308
    %2378 = vmatpush.bf16.msra.mxu0 %v2307
    %2379 = vmatmul.bf16.gmra.mxu0 %v2107
    %v2380 = vpop.f32.mrf.mxu0
    %v2381 = vadd.f32 %v2177, %v2380
    %v2382 = vpop.f32.mrf.mxu0
    %2383 = vdwg.mxu0
    %2384 = vmatpush.bf16.msra.mxu0 %v2322
    %2385 = vmatpush.bf16.msra.mxu0 %v2321
    %2386 = vmatpush.bf16.msra.mxu0 %v2320
    %2387 = vmatpush.bf16.msra.mxu0 %v2319
    %2388 = vmatpush.bf16.msra.mxu0 %v2318
    %2389 = vmatpush.bf16.msra.mxu0 %v2317
    %2390 = vmatpush.bf16.msra.mxu0 %v2316
    %2391 = vmatpush.bf16.msra.mxu0 %v2315
    %2392 = vmatmul.bf16.gmra.mxu0 %v2108
    %v2393 = vpop.f32.mrf.mxu0
    %v2394 = vadd.f32 %v2381, %v2393
    %v2395 = vpop.f32.mrf.mxu0
    %2396 = vdwg.mxu0
    %2397 = vmatpush.bf16.msra.mxu0 %v2330
    %2398 = vmatpush.bf16.msra.mxu0 %v2329
    %2399 = vmatpush.bf16.msra.mxu0 %v2328
    %2400 = vmatpush.bf16.msra.mxu0 %v2327
    %2401 = vmatpush.bf16.msra.mxu0 %v2326
    %2402 = vmatpush.bf16.msra.mxu0 %v2325
    %2403 = vmatpush.bf16.msra.mxu0 %v2324
    %2404 = vmatpush.bf16.msra.mxu0 %v2323
    %2405 = vmatmul.bf16.gmra.mxu0 %v2109
    %v2406 = vpop.f32.mrf.mxu0
    %v2407 = vadd.f32 %v2394, %v2406
    %v2408 = vpop.f32.mrf.mxu0
    %2409 = vdwg.mxu0
    %2410 = vmatpush.bf16.msra.mxu0 %v2338
    %2411 = vmatpush.bf16.msra.mxu0 %v2337
    %2412 = vmatpush.bf16.msra.mxu0 %v2336
    %2413 = vmatpush.bf16.msra.mxu0 %v2335
    %2414 = vmatpush.bf16.msra.mxu0 %v2334
    %2415 = vmatpush.bf16.msra.mxu0 %v2333
    %2416 = vmatpush.bf16.msra.mxu0 %v2332
    %2417 = vmatpush.bf16.msra.mxu0 %v2331
    %2418 = vmatmul.bf16.gmra.mxu0 %v2110
    %v2419 = vpop.f32.mrf.mxu0
    %v2420 = vadd.f32 %v2407, %v2419
    %v2421 = vpop.f32.mrf.mxu0
    %2422 = vdwg.mxu0
    %v2423 = vtanh.pop %v2420
    %v2424 = vld [vmem:[%s5] sm:$0x1]
    %v2426 = vperm.slane %v2424, 0
    %v2428 = vmul.f32 %v2423, %v2426
    %2429 = vadd.xlane.f32.xlu0 %v2428
    %v2430 = vpop.xlane.xlu0 %2429
    %v2431 = vld [vmem:[#allocation2] sm:$0x1]
    %v2433 = vperm.slane %v2431, 0
    %v2435 = vadd.f32 %v2430, %v2433
    %vm2436 = vcmask 7168
    %v2437 = vsel %vm2436, %v2435, -inf
    %v2438 = vrot.slane %v2437, 4
    %v2439 = vmax.f32 %v2437, %v2438
    %v2440 = vrot.slane %v2439, 2
    %v2441 = vmax.f32 %v2439, %v2440
    %v2442 = vrot.slane %v2441, 1
    %v2443 = vmax.f32 %v2441, %v2442
    %v2444 = vsub.f32 %v2435, %v2443
    %v2445 = vmul.f32 %v2444, 1.442695
    %v2446 = vpow.pop %v2445
    %v2447 = vsel %vm2436, %v2446, 0.0
    %v2448 = vrot.slane %v2447, 4
    %v2449 = vadd.f32 %v2447, %v2448
    %v2450 = vrot.slane %v2449, 2
    %v2451 = vadd.f32 %v2449, %v2450
    %v2452 = vrot.slane %v2451, 1
    %v2453 = vadd.f32 %v2451, %v2452
    %v2454 = vrcp.pop %v2453
    %v2455 = vmul.f32 %v2446, %v2454
    %2457 = vset.pattern.permute.xlu0 0
    %2458 = vperm.xlu0 %2457, %v2455
    %v2459 = vpop.permute.xlu0 %2458
    %v2461 = vmul.f32 %v2459, %v2103
    %v2462 = vmul.f32 %v2459, %v2104
    %v2463 = vmul.f32 %v2459, %v2105
    %v2464 = vmul.f32 %v2459, %v2106
    %v2465 = vrot.slane %v2461, 4
    %v2466 = vadd.f32 %v2461, %v2465
    %v2467 = vrot.slane %v2466, 2
    %v2468 = vadd.f32 %v2466, %v2467
    %v2469 = vrot.slane %v2468, 1
    %v2470 = vadd.f32 %v2468, %v2469
    %v2471 = vrot.slane %v2462, 4
    %v2472 = vadd.f32 %v2462, %v2471
    %v2473 = vrot.slane %v2472, 2
    %v2474 = vadd.f32 %v2472, %v2473
    %v2475 = vrot.slane %v2474, 1
    %v2476 = vadd.f32 %v2474, %v2475
    %v2477 = vrot.slane %v2463, 4
    %v2478 = vadd.f32 %v2463, %v2477
    %v2479 = vrot.slane %v2478, 2
    %v2480 = vadd.f32 %v2478, %v2479
    %v2481 = vrot.slane %v2480, 1
    %v2482 = vadd.f32 %v2480, %v2481
    %v2483 = vrot.slane %v2464, 4
    %v2484 = vadd.f32 %v2464, %v2483
    %v2485 = vrot.slane %v2484, 2
    %v2486 = vadd.f32 %v2484, %v2485
    %v2487 = vrot.slane %v2486, 1
    %v2488 = vadd.f32 %v2486, %v2487
    %v2489 = vpack.c.bf16 %v2470, %v2470
    %v2490 = vpack.c.bf16 %v2476, %v2476
    %v2491 = vpack.c.bf16 %v2482, %v2482
    %v2492 = vpack.c.bf16 %v2488, %v2488
    %v2493 = vld [vmem:[#allocation11] sm:$0xf]
    %v2494 = vld [vmem:[#allocation11 + $0x4] sm:$0xf]
    %v2495 = vld [vmem:[#allocation11 + $0x8] sm:$0xf]
    %v2496 = vld [vmem:[#allocation11 + $0xc] sm:$0xf]
    %v2497 = vld [vmem:[#allocation11 + $0x10] sm:$0xf]
    %v2498 = vld [vmem:[#allocation11 + $0x14] sm:$0xf]
    %v2499 = vld [vmem:[#allocation11 + $0x18] sm:$0xf]
    %v2500 = vld [vmem:[#allocation11 + $0x1c] sm:$0xf]
    %v2501 = vld [vmem:[#allocation11 + $0x20] sm:$0xf]
    %v2502 = vld [vmem:[#allocation11 + $0x24] sm:$0xf]
    %v2503 = vld [vmem:[#allocation11 + $0x28] sm:$0xf]
    %v2504 = vld [vmem:[#allocation11 + $0x2c] sm:$0xf]
    %v2505 = vld [vmem:[#allocation11 + $0x30] sm:$0xf]
    %v2506 = vld [vmem:[#allocation11 + $0x34] sm:$0xf]
    %v2507 = vld [vmem:[#allocation11 + $0x38] sm:$0xf]
    %v2508 = vld [vmem:[#allocation11 + $0x3c] sm:$0xf]
    %v2509 = vld [vmem:[#allocation11 + $0x40] sm:$0xf]
    %v2510 = vld [vmem:[#allocation11 + $0x44] sm:$0xf]
    %v2511 = vld [vmem:[#allocation11 + $0x48] sm:$0xf]
    %v2512 = vld [vmem:[#allocation11 + $0x4c] sm:$0xf]
    %v2513 = vld [vmem:[#allocation11 + $0x50] sm:$0xf]
    %v2514 = vld [vmem:[#allocation11 + $0x54] sm:$0xf]
    %v2515 = vld [vmem:[#allocation11 + $0x58] sm:$0xf]
    %v2516 = vld [vmem:[#allocation11 + $0x5c] sm:$0xf]
    %v2517 = vld [vmem:[#allocation11 + $0x60] sm:$0xf]
    %v2518 = vld [vmem:[#allocation11 + $0x64] sm:$0xf]
    %v2519 = vld [vmem:[#allocation11 + $0x68] sm:$0xf]
    %v2520 = vld [vmem:[#allocation11 + $0x6c] sm:$0xf]
    %v2521 = vld [vmem:[#allocation11 + $0x70] sm:$0xf]
    %v2522 = vld [vmem:[#allocation11 + $0x74] sm:$0xf]
    %v2523 = vld [vmem:[#allocation11 + $0x78] sm:$0xf]
    %v2524 = vld [vmem:[#allocation11 + $0x7c] sm:$0xf]
    %v2525 = vld [vmem:[#allocation11 + $0x80] sm:$0xf]
    %v2526 = vld [vmem:[#allocation11 + $0x84] sm:$0xf]
    %v2527 = vld [vmem:[#allocation11 + $0x88] sm:$0xf]
    %v2528 = vld [vmem:[#allocation11 + $0x8c] sm:$0xf]
    %v2529 = vld [vmem:[#allocation11 + $0x90] sm:$0xf]
    %v2530 = vld [vmem:[#allocation11 + $0x94] sm:$0xf]
    %v2531 = vld [vmem:[#allocation11 + $0x98] sm:$0xf]
    %v2532 = vld [vmem:[#allocation11 + $0x9c] sm:$0xf]
    %v2533 = vld [vmem:[#allocation11 + $0xa0] sm:$0xf]
    %v2534 = vld [vmem:[#allocation11 + $0xa4] sm:$0xf]
    %v2535 = vld [vmem:[#allocation11 + $0xa8] sm:$0xf]
    %v2536 = vld [vmem:[#allocation11 + $0xac] sm:$0xf]
    %v2537 = vld [vmem:[#allocation11 + $0xb0] sm:$0xf]
    %v2538 = vld [vmem:[#allocation11 + $0xb4] sm:$0xf]
    %v2539 = vld [vmem:[#allocation11 + $0xb8] sm:$0xf]
    %v2540 = vld [vmem:[#allocation11 + $0xbc] sm:$0xf]
    %v2541 = vld [vmem:[#allocation11 + $0xc0] sm:$0xf]
    %v2542 = vld [vmem:[#allocation11 + $0xc4] sm:$0xf]
    %v2543 = vld [vmem:[#allocation11 + $0xc8] sm:$0xf]
    %v2544 = vld [vmem:[#allocation11 + $0xcc] sm:$0xf]
    %v2545 = vld [vmem:[#allocation11 + $0xd0] sm:$0xf]
    %v2546 = vld [vmem:[#allocation11 + $0xd4] sm:$0xf]
    %v2547 = vld [vmem:[#allocation11 + $0xd8] sm:$0xf]
    %v2548 = vld [vmem:[#allocation11 + $0xdc] sm:$0xf]
    %v2549 = vld [vmem:[#allocation11 + $0xe0] sm:$0xf]
    %v2550 = vld [vmem:[#allocation11 + $0xe4] sm:$0xf]
    %v2551 = vld [vmem:[#allocation11 + $0xe8] sm:$0xf]
    %v2552 = vld [vmem:[#allocation11 + $0xec] sm:$0xf]
    %v2553 = vld [vmem:[#allocation11 + $0xf0] sm:$0xf]
    %v2554 = vld [vmem:[#allocation11 + $0xf4] sm:$0xf]
    %v2555 = vld [vmem:[#allocation11 + $0xf8] sm:$0xf]
    %v2556 = vld [vmem:[#allocation11 + $0xfc] sm:$0xf]
    %v2557 = vld [vmem:[%s8] sm:$0x1]
    %v2622 = vunpack.c.l.b16 %v2493
    %v2623 = vunpack.c.l.b16 %v2494
    %v2624 = vunpack.c.l.b16 %v2495
    %v2625 = vunpack.c.l.b16 %v2496
    %v2626 = vunpack.c.l.b16 %v2497
    %v2627 = vunpack.c.l.b16 %v2498
    %v2628 = vunpack.c.l.b16 %v2499
    %v2629 = vunpack.c.l.b16 %v2500
    %v2630 = vunpack.c.l.b16 %v2501
    %v2631 = vunpack.c.l.b16 %v2502
    %v2632 = vunpack.c.l.b16 %v2503
    %v2633 = vunpack.c.l.b16 %v2504
    %v2634 = vunpack.c.l.b16 %v2505
    %v2635 = vunpack.c.l.b16 %v2506
    %v2636 = vunpack.c.l.b16 %v2507
    %v2637 = vunpack.c.l.b16 %v2508
    %v2638 = vunpack.c.l.b16 %v2509
    %v2639 = vunpack.c.l.b16 %v2510
    %v2640 = vunpack.c.l.b16 %v2511
    %v2641 = vunpack.c.l.b16 %v2512
    %v2642 = vunpack.c.l.b16 %v2513
    %v2643 = vunpack.c.l.b16 %v2514
    %v2644 = vunpack.c.l.b16 %v2515
    %v2645 = vunpack.c.l.b16 %v2516
    %v2646 = vunpack.c.l.b16 %v2517
    %v2647 = vunpack.c.l.b16 %v2518
    %v2648 = vunpack.c.l.b16 %v2519
    %v2649 = vunpack.c.l.b16 %v2520
    %v2650 = vunpack.c.l.b16 %v2521
    %v2651 = vunpack.c.l.b16 %v2522
    %v2652 = vunpack.c.l.b16 %v2523
    %v2653 = vunpack.c.l.b16 %v2524
    %v2654 = vunpack.c.l.b16 %v2525
    %v2655 = vunpack.c.l.b16 %v2526
    %v2656 = vunpack.c.l.b16 %v2527
    %v2657 = vunpack.c.l.b16 %v2528
    %v2658 = vunpack.c.l.b16 %v2529
    %v2659 = vunpack.c.l.b16 %v2530
    %v2660 = vunpack.c.l.b16 %v2531
    %v2661 = vunpack.c.l.b16 %v2532
    %v2662 = vunpack.c.l.b16 %v2533
    %v2663 = vunpack.c.l.b16 %v2534
    %v2664 = vunpack.c.l.b16 %v2535
    %v2665 = vunpack.c.l.b16 %v2536
    %v2666 = vunpack.c.l.b16 %v2537
    %v2667 = vunpack.c.l.b16 %v2538
    %v2668 = vunpack.c.l.b16 %v2539
    %v2669 = vunpack.c.l.b16 %v2540
    %v2670 = vunpack.c.l.b16 %v2541
    %v2671 = vunpack.c.l.b16 %v2542
    %v2672 = vunpack.c.l.b16 %v2543
    %v2673 = vunpack.c.l.b16 %v2544
    %v2674 = vunpack.c.l.b16 %v2545
    %v2675 = vunpack.c.l.b16 %v2546
    %v2676 = vunpack.c.l.b16 %v2547
    %v2677 = vunpack.c.l.b16 %v2548
    %v2678 = vunpack.c.l.b16 %v2549
    %v2679 = vunpack.c.l.b16 %v2550
    %v2680 = vunpack.c.l.b16 %v2551
    %v2681 = vunpack.c.l.b16 %v2552
    %v2682 = vunpack.c.l.b16 %v2553
    %v2683 = vunpack.c.l.b16 %v2554
    %v2684 = vunpack.c.l.b16 %v2555
    %v2685 = vunpack.c.l.b16 %v2556
    %v2686 = vpack.c.b16 %v2623, %v2622
    %v2687 = vpack.c.b16 %v2625, %v2624
    %v2688 = vpack.c.b16 %v2627, %v2626
    %v2689 = vpack.c.b16 %v2629, %v2628
    %v2690 = vpack.c.b16 %v2631, %v2630
    %v2691 = vpack.c.b16 %v2633, %v2632
    %v2692 = vpack.c.b16 %v2635, %v2634
    %v2693 = vpack.c.b16 %v2637, %v2636
    %v2694 = vpack.c.b16 %v2639, %v2638
    %v2695 = vpack.c.b16 %v2641, %v2640
    %v2696 = vpack.c.b16 %v2643, %v2642
    %v2697 = vpack.c.b16 %v2645, %v2644
    %v2698 = vpack.c.b16 %v2647, %v2646
    %v2699 = vpack.c.b16 %v2649, %v2648
    %v2700 = vpack.c.b16 %v2651, %v2650
    %v2701 = vpack.c.b16 %v2653, %v2652
    %v2702 = vpack.c.b16 %v2655, %v2654
    %v2703 = vpack.c.b16 %v2657, %v2656
    %v2704 = vpack.c.b16 %v2659, %v2658
    %v2705 = vpack.c.b16 %v2661, %v2660
    %v2706 = vpack.c.b16 %v2663, %v2662
    %v2707 = vpack.c.b16 %v2665, %v2664
    %v2708 = vpack.c.b16 %v2667, %v2666
    %v2709 = vpack.c.b16 %v2669, %v2668
    %v2710 = vpack.c.b16 %v2671, %v2670
    %v2711 = vpack.c.b16 %v2673, %v2672
    %v2712 = vpack.c.b16 %v2675, %v2674
    %v2713 = vpack.c.b16 %v2677, %v2676
    %v2714 = vpack.c.b16 %v2679, %v2678
    %v2715 = vpack.c.b16 %v2681, %v2680
    %v2716 = vpack.c.b16 %v2683, %v2682
    %v2717 = vpack.c.b16 %v2685, %v2684
    %2750 = vmatpush.bf16.msra.mxu0 %v2693
    %2751 = vmatpush.bf16.msra.mxu0 %v2692
    %2752 = vmatpush.bf16.msra.mxu0 %v2691
    %2753 = vmatpush.bf16.msra.mxu0 %v2690
    %2754 = vmatpush.bf16.msra.mxu0 %v2689
    %2755 = vmatpush.bf16.msra.mxu0 %v2688
    %2756 = vmatpush.bf16.msra.mxu0 %v2687
    %2757 = vmatpush.bf16.msra.mxu0 %v2686
    %2758 = vmatmul.bf16.gmra.mxu0 %v2489
    %v2759 = vpop.f32.mrf.mxu0
    %v2760 = vadd.f32 %v2557, %v2759
    %v2761 = vpop.f32.mrf.mxu0
    %2762 = vdwg.mxu0
    %2763 = vmatpush.bf16.msra.mxu0 %v2701
    %2764 = vmatpush.bf16.msra.mxu0 %v2700
    %2765 = vmatpush.bf16.msra.mxu0 %v2699
    %2766 = vmatpush.bf16.msra.mxu0 %v2698
    %2767 = vmatpush.bf16.msra.mxu0 %v2697
    %2768 = vmatpush.bf16.msra.mxu0 %v2696
    %2769 = vmatpush.bf16.msra.mxu0 %v2695
    %2770 = vmatpush.bf16.msra.mxu0 %v2694
    %2771 = vmatmul.bf16.gmra.mxu0 %v2490
    %v2772 = vpop.f32.mrf.mxu0
    %v2773 = vadd.f32 %v2760, %v2772
    %v2774 = vpop.f32.mrf.mxu0
    %2775 = vdwg.mxu0
    %2776 = vmatpush.bf16.msra.mxu0 %v2709
    %2777 = vmatpush.bf16.msra.mxu0 %v2708
    %2778 = vmatpush.bf16.msra.mxu0 %v2707
    %2779 = vmatpush.bf16.msra.mxu0 %v2706
    %2780 = vmatpush.bf16.msra.mxu0 %v2705
    %2781 = vmatpush.bf16.msra.mxu0 %v2704
    %2782 = vmatpush.bf16.msra.mxu0 %v2703
    %2783 = vmatpush.bf16.msra.mxu0 %v2702
    %2784 = vmatmul.bf16.gmra.mxu0 %v2491
    %v2785 = vpop.f32.mrf.mxu0
    %v2786 = vadd.f32 %v2773, %v2785
    %v2787 = vpop.f32.mrf.mxu0
    %2788 = vdwg.mxu0
    %2789 = vmatpush.bf16.msra.mxu0 %v2717
    %2790 = vmatpush.bf16.msra.mxu0 %v2716
    %2791 = vmatpush.bf16.msra.mxu0 %v2715
    %2792 = vmatpush.bf16.msra.mxu0 %v2714
    %2793 = vmatpush.bf16.msra.mxu0 %v2713
    %2794 = vmatpush.bf16.msra.mxu0 %v2712
    %2795 = vmatpush.bf16.msra.mxu0 %v2711
    %2796 = vmatpush.bf16.msra.mxu0 %v2710
    %2797 = vmatmul.bf16.gmra.mxu0 %v2492
    %v2798 = vpop.f32.mrf.mxu0
    %v2799 = vadd.f32 %v2786, %v2798
    %v2800 = vpop.f32.mrf.mxu0
    %2801 = vdwg.mxu0
    %2802 = vst [vmem:[#allocation12] sm:$0x1] %v2799
    // Predicated region
    $region58: #{tpu_custom_call.1} parent=1 // pred_check
      _
    $region59: #{tpu_custom_call.1} parent=1 // pred_check_branch
      %2804 = sbr.rel (0) target = $region61
    $region60: #{tpu_custom_call.1} parent=1 // pred_region
      %2806 = vsyncadd [#allocation5], 0
      %s2808 = sshll.u32 [#allocation12], 4
      %s2809 = int_to_ptr.vmem [resolvable:$true] %s2808
      %s2810 = sshll.u32 %s9, 4
      %s2811 = int_to_ptr.hbm [resolvable:$true] %s2810
      %2813 = dma.vmem_to_hbm [thread:$0]  %s2809, 16, %s2811, [#allocation5]
    $region61: #{tpu_custom_call.1} parent=1 // pred_fallthru
      _
    // Predicated region
    $region62: #{tpu_custom_call.1} parent=1 // pred_check
      _
    $region63: #{tpu_custom_call.1} parent=1 // pred_check_branch
      %2815 = sbr.rel (0) target = $region65
    $region64: #{tpu_custom_call.1} parent=1 // pred_region
      %2817 = dma.done [#allocation5], 16
    $region65: #{tpu_custom_call.1} parent=1 // pred_fallthru
      _
    %2818 = vsyncpa [#allocation4], 1
    %2819 = vsyncpa [#allocation7], 1
    %2820 = vsyncpa [#allocation10], 1
    %2821 = vsyncpa [#allocation5], 1

</llo_original>
